<compile_context>
chip_gen: v6e
topology: v6e:2x2x1
jax: 0.10.0
libtpu: 0.0.40
codegen_flags: <defaults>
</compile_context>

<pallas_src>
import math

import jax
import jax.numpy as jnp
from jax.experimental import pallas as pl
from jax.experimental.pallas import tpu as pltpu

NEG_SLOPE = 0.1      # nn.LeakyReLU(negative_slope=0.1)
LN_EPS = 1e-5        # nn.LayerNorm default eps
CONDITION_DIM = 256  # Network.condition_dim
LANE = 128


def _round_up(n, m):
    return ((n + m - 1) // m) * m


def _pick_tile_b(B):
    # Tiny batches: one tile covering the whole (8-sublane-rounded) batch.
    if B <= 16:
        return _round_up(max(B, 8), 8)
    # Large tiles amortize per-step overhead and fill the 256-wide MXU
    # (v6e/v7x); cap at 512 and keep >=2 grid steps so v7x's second
    # TensorCore gets work under dimension_semantics=("parallel",).
    t = min(512, _round_up(pl.cdiv(B, 2), 16))
    return max(t, 16)


# ----------------------------- kernel --------------------------------
def make_network_kernel(offs, res_has_block, hid_dims, dims):
    """Fused forward kernel. `offs` holds static row offsets into the packed
    parameter slabs (Python ints -> free static Ref slices)."""
    hslab_w = dims["HSLAB_W"]

    def kernel(in_ref, wc_ref, bc_ref, wh_ref, bh_ref, wcnd_ref, out_ref):

        def lrelu(v):
            # 1 mul + 1 max (valid because NEG_SLOPE < 1)
            return jnp.maximum(v, NEG_SLOPE * v)

        # Linear into the 256-wide condition slab. Bias rows are read from the
        # resident slab at point of use (no hoisted full-slab loads).
        def lin_c(act, wname, bname):
            r0, nr = offs[wname]
            y = jnp.dot(act.astype(jnp.bfloat16), wc_ref[r0:r0 + nr, :],
                        preferred_element_type=jnp.float32)
            b0 = offs[bname]
            return y + bc_ref[b0:b0 + 1, :]

        # Linear into the 128-wide hidden slab.
        def lin_h(act, wname, bname):
            r0, nr = offs[wname]
            y = jnp.dot(act.astype(jnp.bfloat16), wh_ref[r0:r0 + nr, :],
                        preferred_element_type=jnp.float32)
            b0 = offs[bname]
            return y + bh_ref[b0:b0 + 1, :]

        inp = in_ref[...]   # (tile_b, IN_PAD) bf16: [x | state | domain | temb]

        # ---- condition = state_mlp + domain_mlp + time_mlp ----
        # Accumulated incrementally to keep vreg live ranges short.
        a = lin_c(inp, "s0_w", "s0_b")
        a = lin_c(lrelu(a), "s1_w", "s1_b")
        cond = lin_c(lrelu(a), "s2_w", "s2_b")

        a = lin_c(inp, "d0_w", "d0_b")
        a = lin_c(lrelu(a), "d1_w", "d1_b")
        cond = cond + lin_c(lrelu(a), "d2_w", "d2_b")

        a = lin_c(inp, "t0_w", "t0_b")
        cond = cond + lin_c(lrelu(a), "t1_w", "t1_b")

        # Hoisted LeakyReLU(condition) + one lane-dense MXU pass covering ALL
        # per-block condition_mlp linears (weights concatenated along out dim).
        cond_all = jnp.dot(lrelu(cond).astype(jnp.bfloat16), wcnd_ref[...],
                           preferred_element_type=jnp.float32)

        # ---- init block: Linear -> LReLU (reads the x segment via folded W) --
        h = lrelu(lin_h(inp, "init_w", "init_b"))

        lane_ids = jax.lax.broadcasted_iota(jnp.int32, (1, hslab_w), 1)

        # ---- NetBlocks (norm=True, res_unit=True, conditioned) ----
        # TODO(synk): for many blocks of uniform width, switch this static
        # Python unroll to lax.fori_loop over stacked per-block weight slabs.
        # TODO(synk): if the VALU slot proves binding on v6e/v7x, run the
        # lrelu/bias/residual chains in bf16 (keep LN statistics in f32).
        for bi, has_res in enumerate(res_has_block):
            din = hid_dims[bi]            # true (un-padded) feature count
            x_in = h
            # LayerNorm over the true `din` features.  Padded lanes of x_in are
            # exactly 0 (zero-padded weights/biases throughout), so the mean is
            # exact; variance uses the safer two-pass form masked to real lanes.
            mu = jnp.sum(x_in, axis=-1, keepdims=True) * (1.0 / din)
            xc = x_in - mu
            xc_m = jnp.where(lane_ids < din, xc, 0.0)
            var = jnp.sum(xc_m * xc_m, axis=-1, keepdims=True) * (1.0 / din)
            gi = offs[f"ln_g_{bi}"]
            bti = offs[f"ln_b_{bi}"]
            hn = (xc * jax.lax.rsqrt(var + LN_EPS) * bh_ref[gi:gi + 1, :]
                  + bh_ref[bti:bti + 1, :])
            # block1
            hh = lrelu(lin_h(hn, f"b1_w_{bi}", f"b1_b_{bi}"))
            # condition_mlp result for this block (lane-aligned static slice)
            ci = offs[f"cond_b_{bi}"]
            hh = hh + (cond_all[:, bi * hslab_w:(bi + 1) * hslab_w]
                       + bh_ref[ci:ci + 1, :])
            # block2
            hh = lrelu(lin_h(hh, f"b2_w_{bi}", f"b2_b_{bi}"))
            # residual path on the un-normalized block input
            if has_res:
                hh = hh + lrelu(lin_h(x_in, f"res_w_{bi}", f"res_b_{bi}"))
            else:
                hh = hh + x_in  # nn.Identity
            h = hh

        # ---- final block: Linear -> LReLU (lane-dense bf16 store) ----
        out_ref[...] = lrelu(lin_h(h, "final_w", "final_b")).astype(out_ref.dtype)

    return kernel


# ----------------------------- host-side packing ------------------------------
def pack_params(params, res_has_block, dim, domain_dim, hid_dims):
    """Pack the flat PyTorch-ordered parameter list into 5 lane-padded slabs:
       w_cond (bf16, width 256), b_cond (f32, width 256, one row per 8),
       w_hid  (bf16, width HSLAB), b_hid (f32, width HSLAB, incl. LN params),
       w_cnd_all (bf16, (256, NBLK*HSLAB)).  First-layer weights (s0/d0/t0/init)
       are expanded to the packed-input row space so segment selection is free."""
    cond = CONDITION_DIM
    # Packed-input column layout: [x | state | domain | temb]
    x_off, state_off = 0, dim
    domain_off, temb_off = 2 * dim, 2 * dim + domain_dim
    in_width = 3 * dim + domain_dim
    in_pad = _round_up(in_width, LANE)
    hslab_w = max([_round_up(dim, LANE)] + [_round_up(h, LANE) for h in hid_dims])

    P = list(params)
    pos = [0]

    def pop(n):
        v = P[pos[0]:pos[0] + n]
        pos[0] += n
        return v

    wc_parts, wh_parts, wcnd_parts = [], [], []
    bc_rows, bh_rows = [], []          # one (1, width) f32 row each, stored at 8*i
    offs = {}

    def add_wc(name, w, nrows, row_off=0):
        r0 = sum(a.shape[0] for a in wc_parts)
        wp = jnp.zeros((nrows, cond), jnp.float32)
        wp = wp.at[row_off:row_off + w.shape[0], :].set(w)
        wc_parts.append(wp)
        offs[name] = (r0, nrows)

    def add_bc(name, b):
        offs[name] = 8 * len(bc_rows)          # 8-aligned row offset
        bc_rows.append(jnp.asarray(b, jnp.float32).reshape(1, cond))

    def add_wh(name, w, nrows, row_off=0):
        r0 = sum(a.shape[0] for a in wh_parts)
        wp = jnp.zeros((nrows, hslab_w), jnp.float32)
        wp = wp.at[row_off:row_off + w.shape[0], :w.shape[1]].set(w)
        wh_parts.append(wp)
        offs[name] = (r0, nrows)

    def add_bh(name, b):
        offs[name] = 8 * len(bh_rows)          # 8-aligned row offset
        b = jnp.asarray(b, jnp.float32).reshape(1, -1)
        bp = jnp.zeros((1, hslab_w), jnp.float32).at[:, :b.shape[1]].set(b)
        bh_rows.append(bp)

    # state_mlp (first layer folded into packed-input rows)
    w, b = pop(2); add_wc("s0_w", w, in_pad, state_off); add_bc("s0_b", b)
    w, b = pop(2); add_wc("s1_w", w, cond);              add_bc("s1_b", b)
    w, b = pop(2); add_wc("s2_w", w, cond);              add_bc("s2_b", b)
    # domain_mlp
    w, b = pop(2); add_wc("d0_w", w, in_pad, domain_off); add_bc("d0_b", b)
    w, b = pop(2); add_wc("d1_w", w, cond);               add_bc("d1_b", b)
    w, b = pop(2); add_wc("d2_w", w, cond);               add_bc("d2_b", b)
    # time_mlp (after sinusoidal embedding)
    w, b = pop(2); add_wc("t0_w", w, in_pad, temb_off);   add_bc("t0_b", b)
    w, b = pop(2); add_wc("t1_w", w, cond);               add_bc("t1_b", b)
    # init block (reads the x segment)
    w, b = pop(2); add_wh("init_w", w, in_pad, x_off);    add_bh("init_b", b)
    # NetBlocks
    for bi, has_res in enumerate(res_has_block):
        din, dout = hid_dims[bi], hid_dims[bi + 1]
        din_pad, dout_pad = _round_up(din, LANE), _round_up(dout, LANE)
        g, bta, b1w, b1b, cw, cb, b2w, b2b = pop(8)
        add_bh(f"ln_g_{bi}", g)     # padded gamma entries stay 0
        add_bh(f"ln_b_{bi}", bta)
        add_wh(f"b1_w_{bi}", b1w, din_pad); add_bh(f"b1_b_{bi}", b1b)
        cwp = jnp.zeros((cond, hslab_w), jnp.float32).at[:, :cw.shape[1]].set(cw)
        wcnd_parts.append(cwp)
        add_bh(f"cond_b_{bi}", cb)
        add_wh(f"b2_w_{bi}", b2w, dout_pad); add_bh(f"b2_b_{bi}", b2b)
        if has_res:
            rw, rb = pop(2)
            add_wh(f"res_w_{bi}", rw, din_pad); add_bh(f"res_b_{bi}", rb)
    # final block
    w, b = pop(2)
    add_wh("final_w", w, _round_up(hid_dims[-1], LANE)); add_bh("final_b", b)

    def rows_to_slab(rows, width):
        slab = jnp.zeros((8 * len(rows), width), jnp.float32)
        for i, r in enumerate(rows):
            slab = slab.at[8 * i:8 * i + 1, :].set(r)
        return slab

    w_cond = jnp.concatenate(wc_parts, axis=0).astype(jnp.bfloat16)
    b_cond = rows_to_slab(bc_rows, cond)
    w_hid = jnp.concatenate(wh_parts, axis=0).astype(jnp.bfloat16)
    b_hid = rows_to_slab(bh_rows, hslab_w)
    w_cnd_all = jnp.concatenate(wcnd_parts, axis=1).astype(jnp.bfloat16)

    dims = dict(IN_PAD=in_pad, IN_WIDTH=in_width, HSLAB_W=hslab_w)
    return (w_cond, b_cond, w_hid, b_hid, w_cnd_all), offs, dims


# ----------------------------- glue (plain JAX) -------------------------------
def sinusoidal_time_emb(time, dim):
    # SinusoidalTimeEmbeddings.forward -- note the spec uses [sin, -cos].
    half_dim = dim // 2
    if half_dim == 0:
        half_dim = dim
    scale = math.log(10000.0) / half_dim
    freqs = jnp.exp(jnp.arange(half_dim, dtype=jnp.float32) * (-scale))
    e = time.astype(jnp.float32)[:, None] * freqs[None, :]
    return jnp.concatenate([jnp.sin(e), -jnp.cos(e)], axis=-1)


def init_params(key, dim, hid_dims, domain_dim):
    """Deterministic synthetic parameters matching the module's shapes
    (flat list, same order as the PyTorch module's forward traversal)."""
    params = []

    def add_linear(k, din, dout):
        kw, kb = jax.random.split(k)
        limit = math.sqrt(6.0 / (din + dout))             # xavier_uniform
        w = jax.random.uniform(kw, (din, dout), jnp.float32, -limit, limit)
        bb = 1.0 / math.sqrt(din)
        b = jax.random.uniform(kb, (1, dout), jnp.float32, -bb, bb)
        params.append(w)
        params.append(b)

    keys = iter(jax.random.split(key, 64))

    # state_mlp
    add_linear(next(keys), dim, CONDITION_DIM)
    add_linear(next(keys), CONDITION_DIM, CONDITION_DIM)
    add_linear(next(keys), CONDITION_DIM, CONDITION_DIM)
    # domain_mlp
    add_linear(next(keys), domain_dim, CONDITION_DIM)
    add_linear(next(keys), CONDITION_DIM, CONDITION_DIM)
    add_linear(next(keys), CONDITION_DIM, CONDITION_DIM)
    # time_mlp
    add_linear(next(keys), dim, CONDITION_DIM)
    add_linear(next(keys), CONDITION_DIM, CONDITION_DIM)
    # init block
    add_linear(next(keys), dim, hid_dims[0])
    # NetBlocks
    res_has_block = []
    for din, dout in zip(hid_dims[:-1], hid_dims[1:]):
        params.append(jnp.ones((1, din), jnp.float32))    # LayerNorm gamma
        params.append(jnp.zeros((1, din), jnp.float32))   # LayerNorm beta
        add_linear(next(keys), din, dout)                  # block1
        add_linear(next(keys), CONDITION_DIM, dout)        # condition_mlp Linear
        add_linear(next(keys), dout, dout)                 # block2
        if din != dout:
            add_linear(next(keys), din, dout)              # res Block
            res_has_block.append(True)
        else:
            res_has_block.append(False)                    # nn.Identity
    # final block
    add_linear(next(keys), hid_dims[-1], dim)
    return params, tuple(res_has_block)


def network_forward(x, state, domain, time, packed, offs, dims,
                    res_has_block, hid_dims, dim):
    w_cond, b_cond, w_hid, b_hid, w_cnd_all = packed
    B = x.shape[0]
    in_pad, in_width, hslab_w = dims["IN_PAD"], dims["IN_WIDTH"], dims["HSLAB_W"]

    tile_b = _pick_tile_b(B)
    b_pad = _round_up(B, tile_b)

    # ONE packed bf16 input slab: [x | state | domain | temb], lane-padded once.
    temb = sinusoidal_time_emb(time, dim)
    packed_rows = jnp.concatenate([x, state, domain, temb],
                                  axis=-1).astype(jnp.bfloat16)
    inp = jnp.zeros((b_pad, in_pad), jnp.bfloat16).at[:B, :in_width].set(packed_rows)

    kernel = make_network_kernel(offs, res_has_block, hid_dims, dims)

    def resident_spec(arr):
        # Full-array block, constant index -> stays VMEM-resident across steps.
        return pl.BlockSpec(arr.shape, lambda i: (0, 0))

    # Explicit VMEM budget with headroom (param slabs are double-buffered by
    # the pipeline even though they never change; they total ~1 MiB here).
    param_bytes = sum(int(a.size) * a.dtype.itemsize for a in packed)
    io_bytes = tile_b * (in_pad + hslab_w) * 2        # bf16 in + out per step
    vmem_limit = int(min(96 << 20,
                         max(16 << 20, 2 * param_bytes + 4 * io_bytes + (2 << 20))))

    flops = 2 * b_pad * (w_cond.shape[0] * w_cond.shape[1]
                         + w_hid.shape[0] * w_hid.shape[1]
                         + w_cnd_all.shape[0] * w_cnd_all.shape[1])
    bytes_accessed = int(inp.size) * 2 + b_pad * hslab_w * 2 + param_bytes

    out = pl.pallas_call(
        kernel,
        out_shape=jax.ShapeDtypeStruct((b_pad, hslab_w), jnp.bfloat16),
        grid=(b_pad // tile_b,),
        in_specs=[
            pl.BlockSpec((tile_b, in_pad), lambda i: (i, 0)),   # packed input
            resident_spec(w_cond),
            resident_spec(b_cond),
            resident_spec(w_hid),
            resident_spec(b_hid),
            resident_spec(w_cnd_all),
        ],
        out_specs=pl.BlockSpec((tile_b, hslab_w), lambda i: (i, 0)),
        compiler_params=pltpu.CompilerParams(
            dimension_semantics=("parallel",),
            vmem_limit_bytes=vmem_limit),
        cost_estimate=pl.CostEstimate(flops=int(flops), transcendentals=0,
                                      bytes_accessed=int(bytes_accessed)),
    )(inp, w_cond, b_cond, w_hid, b_hid, w_cnd_all)

    return out[:B, :dim]


# -------------------------- pure-JAX reference --------------------------------
def reference_forward(x, state, domain, time, params, res_has_block, dim):
    P = list(params)
    pos = [0]

    def pop(n):
        v = P[pos[0]:pos[0] + n]
        pos[0] += n
        return v

    def lin(v, w, b):
        return jnp.dot(v, w, precision=jax.lax.Precision.HIGHEST) + b

    lrelu = lambda v: jnp.where(v > 0, v, NEG_SLOPE * v)

    temb = sinusoidal_time_emb(time, dim)
    sw0, sb0, sw1, sb1, sw2, sb2 = pop(6)
    s = lin(lrelu(lin(lrelu(lin(state, sw0, sb0)), sw1, sb1)), sw2, sb2)
    dw0, db0, dw1, db1, dw2, db2 = pop(6)
    d = lin(lrelu(lin(lrelu(lin(domain, dw0, db0)), dw1, db1)), dw2, db2)
    tw0, tb0, tw1, tb1 = pop(4)
    t = lin(lrelu(lin(temb, tw0, tb0)), tw1, tb1)
    condition = s + d + t

    iw, ib = pop(2)
    h = lrelu(lin(x, iw, ib))
    for has_res in res_has_block:
        ln_g, ln_b, b1w, b1b, cw, cb, b2w, b2b = pop(8)
        x_in = h
        mu = jnp.mean(x_in, axis=-1, keepdims=True)
        var = jnp.mean(jnp.square(x_in - mu), axis=-1, keepdims=True)
        hn = (x_in - mu) / jnp.sqrt(var + LN_EPS) * ln_g + ln_b
        hh = lrelu(lin(hn, b1w, b1b)) + lin(lrelu(condition), cw, cb)
        hh = lrelu(lin(hh, b2w, b2b))
        if has_res:
            rw, rb = pop(2)
            hh = hh + lrelu(lin(x_in, rw, rb))
        else:
            hh = hh + x_in
        h = hh
    fw, fb = pop(2)
    return lrelu(lin(h, fw, fb))


# ------------------------------------ main ------------------------------------
if __name__ == "__main__":
    B = 4
    DIM = 16          # Network(dim=16)  -> x, state, output feature dim
    DOMAIN_DIM = 16   # domain_dim
    HID_DIMS = (8, 16)

    key = jax.random.PRNGKey(0)
    kx, ks, kd, kt, kp = jax.random.split(key, 5)
    x = jax.random.normal(kx, (B, DIM), jnp.float32)
    state = jax.random.normal(ks, (B, DIM), jnp.float32)
    domain = jax.random.normal(kd, (B, DOMAIN_DIM), jnp.float32)
    time = jax.random.uniform(kt, (B,), jnp.float32, 0.0, 10.0)

    params, res_has_block = init_params(kp, DIM, HID_DIMS, DOMAIN_DIM)
    packed, offs, dims = pack_params(params, res_has_block, DIM, DOMAIN_DIM, HID_DIMS)

    out = network_forward(x, state, domain, time, packed, offs, dims,
                          res_has_block, HID_DIMS, DIM)
    out = jax.block_until_ready(out)

    ref = reference_forward(x, state, domain, time, params, res_has_block, DIM)
    assert out.shape == (B, DIM)
    out_f32 = out.astype(jnp.float32)
    assert bool(jnp.all(jnp.isfinite(out_f32)))
    # bf16 inputs/weights/output (f32 accumulation) vs HIGHEST-precision f32 ref
    assert bool(jnp.allclose(out_f32, ref, rtol=5e-2, atol=5e-2)), \
        "mismatch vs JAX reference"

    print("KERNEL_OK")
</pallas_src>

<mosaic_0001>
module attributes {stable_mosaic.version = 11 : i64} {
  func.func @kernel(%arg0: i32, %arg1: memref<8x128xbf16, #tpu.memory_space<vmem>>, %arg2: memref<1664x256xbf16, #tpu.memory_space<vmem>>, %arg3: memref<64x256xf32, #tpu.memory_space<vmem>>, %arg4: memref<640x128xbf16, #tpu.memory_space<vmem>>, %arg5: memref<64x128xf32, #tpu.memory_space<vmem>>, %arg6: memref<256x128xbf16, #tpu.memory_space<vmem>>, %arg7: memref<8x128xbf16, #tpu.memory_space<vmem>>) attributes {dimension_semantics = [#tpu.dimension_semantics<parallel>], iteration_bounds = array<i64: 1>, scalar_prefetch = 0 : i64, scratch_operands = 0 : i64, tpu.core_type = #tpu.core_type<tc>, window_params = [{transform_indices = @transform_0, window_bounds = array<i64: 8, 128>}, {pipeline_mode = #tpu.pipeline_mode<synchronous>, transform_indices = @transform_1, window_bounds = array<i64: 1664, 256>}, {pipeline_mode = #tpu.pipeline_mode<synchronous>, transform_indices = @transform_2, window_bounds = array<i64: 64, 256>}, {pipeline_mode = #tpu.pipeline_mode<synchronous>, transform_indices = @transform_3, window_bounds = array<i64: 640, 128>}, {pipeline_mode = #tpu.pipeline_mode<synchronous>, transform_indices = @transform_4, window_bounds = array<i64: 64, 128>}, {pipeline_mode = #tpu.pipeline_mode<synchronous>, transform_indices = @transform_5, window_bounds = array<i64: 256, 128>}, {transform_indices = @transform_6, window_bounds = array<i64: 8, 128>}]} {
    %c0 = arith.constant 0 : index
    %c0_0 = arith.constant 0 : index
    %0 = vector.load %arg1[%c0, %c0_0] : memref<8x128xbf16, #tpu.memory_space<vmem>>, vector<8x128xbf16>
    %c0_1 = arith.constant 0 : index
    %c0_2 = arith.constant 0 : index
    %1 = vector.load %arg2[%c0_1, %c0_2] : memref<1664x256xbf16, #tpu.memory_space<vmem>>, vector<128x256xbf16>
    %cst = arith.constant dense<0.000000e+00> : vector<8x256xf32>
    %2 = tpu.matmul %0, %1, %cst {dimension_numbers = #tpu.dot_dimension_numbers<[1], [0], [0], [1], [0, 0, 1, 1], [], []>} : vector<8x128xbf16>, vector<128x256xbf16>, vector<8x256xf32> -> vector<8x256xf32>
    %c0_3 = arith.constant 0 : index
    %c0_4 = arith.constant 0 : index
    %3 = vector.load %arg3[%c0_3, %c0_4] : memref<64x256xf32, #tpu.memory_space<vmem>>, vector<1x256xf32>
    %4 = vector.broadcast %3 : vector<1x256xf32> to vector<8x256xf32>
    %5 = arith.addf %2, %4 : vector<8x256xf32>
    %cst_5 = arith.constant 1.000000e-01 : f32
    %6 = vector.broadcast %cst_5 : f32 to vector<8x256xf32>
    %7 = arith.mulf %6, %5 : vector<8x256xf32>
    %8 = arith.maximumf %5, %7 : vector<8x256xf32>
    %9 = arith.truncf %8 : vector<8x256xf32> to vector<8x256xbf16>
    %c128 = arith.constant 128 : index
    %c0_6 = arith.constant 0 : index
    %10 = vector.load %arg2[%c128, %c0_6] : memref<1664x256xbf16, #tpu.memory_space<vmem>>, vector<256x256xbf16>
    %cst_7 = arith.constant dense<0.000000e+00> : vector<8x256xf32>
    %11 = tpu.matmul %9, %10, %cst_7 {dimension_numbers = #tpu.dot_dimension_numbers<[1], [0], [0], [1], [0, 0, 1, 1], [], []>} : vector<8x256xbf16>, vector<256x256xbf16>, vector<8x256xf32> -> vector<8x256xf32>
    %c8 = arith.constant 8 : index
    %c0_8 = arith.constant 0 : index
    %12 = vector.load %arg3[%c8, %c0_8] : memref<64x256xf32, #tpu.memory_space<vmem>>, vector<1x256xf32>
    %13 = vector.broadcast %12 : vector<1x256xf32> to vector<8x256xf32>
    %14 = arith.addf %11, %13 : vector<8x256xf32>
    %cst_9 = arith.constant 1.000000e-01 : f32
    %15 = vector.broadcast %cst_9 : f32 to vector<8x256xf32>
    %16 = arith.mulf %15, %14 : vector<8x256xf32>
    %17 = arith.maximumf %14, %16 : vector<8x256xf32>
    %18 = arith.truncf %17 : vector<8x256xf32> to vector<8x256xbf16>
    %c384 = arith.constant 384 : index
    %c0_10 = arith.constant 0 : index
    %19 = vector.load %arg2[%c384, %c0_10] : memref<1664x256xbf16, #tpu.memory_space<vmem>>, vector<256x256xbf16>
    %cst_11 = arith.constant dense<0.000000e+00> : vector<8x256xf32>
    %20 = tpu.matmul %18, %19, %cst_11 {dimension_numbers = #tpu.dot_dimension_numbers<[1], [0], [0], [1], [0, 0, 1, 1], [], []>} : vector<8x256xbf16>, vector<256x256xbf16>, vector<8x256xf32> -> vector<8x256xf32>
    %c16 = arith.constant 16 : index
    %c0_12 = arith.constant 0 : index
    %21 = vector.load %arg3[%c16, %c0_12] : memref<64x256xf32, #tpu.memory_space<vmem>>, vector<1x256xf32>
    %22 = vector.broadcast %21 : vector<1x256xf32> to vector<8x256xf32>
    %23 = arith.addf %20, %22 : vector<8x256xf32>
    %c640 = arith.constant 640 : index
    %c0_13 = arith.constant 0 : index
    %24 = vector.load %arg2[%c640, %c0_13] : memref<1664x256xbf16, #tpu.memory_space<vmem>>, vector<128x256xbf16>
    %cst_14 = arith.constant dense<0.000000e+00> : vector<8x256xf32>
    %25 = tpu.matmul %0, %24, %cst_14 {dimension_numbers = #tpu.dot_dimension_numbers<[1], [0], [0], [1], [0, 0, 1, 1], [], []>} : vector<8x128xbf16>, vector<128x256xbf16>, vector<8x256xf32> -> vector<8x256xf32>
    %c24 = arith.constant 24 : index
    %c0_15 = arith.constant 0 : index
    %26 = vector.load %arg3[%c24, %c0_15] : memref<64x256xf32, #tpu.memory_space<vmem>>, vector<1x256xf32>
    %27 = vector.broadcast %26 : vector<1x256xf32> to vector<8x256xf32>
    %28 = arith.addf %25, %27 : vector<8x256xf32>
    %cst_16 = arith.constant 1.000000e-01 : f32
    %29 = vector.broadcast %cst_16 : f32 to vector<8x256xf32>
    %30 = arith.mulf %29, %28 : vector<8x256xf32>
    %31 = arith.maximumf %28, %30 : vector<8x256xf32>
    %32 = arith.truncf %31 : vector<8x256xf32> to vector<8x256xbf16>
    %c768 = arith.constant 768 : index
    %c0_17 = arith.constant 0 : index
    %33 = vector.load %arg2[%c768, %c0_17] : memref<1664x256xbf16, #tpu.memory_space<vmem>>, vector<256x256xbf16>
    %cst_18 = arith.constant dense<0.000000e+00> : vector<8x256xf32>
    %34 = tpu.matmul %32, %33, %cst_18 {dimension_numbers = #tpu.dot_dimension_numbers<[1], [0], [0], [1], [0, 0, 1, 1], [], []>} : vector<8x256xbf16>, vector<256x256xbf16>, vector<8x256xf32> -> vector<8x256xf32>
    %c32 = arith.constant 32 : index
    %c0_19 = arith.constant 0 : index
    %35 = vector.load %arg3[%c32, %c0_19] : memref<64x256xf32, #tpu.memory_space<vmem>>, vector<1x256xf32>
    %36 = vector.broadcast %35 : vector<1x256xf32> to vector<8x256xf32>
    %37 = arith.addf %34, %36 : vector<8x256xf32>
    %cst_20 = arith.constant 1.000000e-01 : f32
    %38 = vector.broadcast %cst_20 : f32 to vector<8x256xf32>
    %39 = arith.mulf %38, %37 : vector<8x256xf32>
    %40 = arith.maximumf %37, %39 : vector<8x256xf32>
    %41 = arith.truncf %40 : vector<8x256xf32> to vector<8x256xbf16>
    %c1024 = arith.constant 1024 : index
    %c0_21 = arith.constant 0 : index
    %42 = vector.load %arg2[%c1024, %c0_21] : memref<1664x256xbf16, #tpu.memory_space<vmem>>, vector<256x256xbf16>
    %cst_22 = arith.constant dense<0.000000e+00> : vector<8x256xf32>
    %43 = tpu.matmul %41, %42, %cst_22 {dimension_numbers = #tpu.dot_dimension_numbers<[1], [0], [0], [1], [0, 0, 1, 1], [], []>} : vector<8x256xbf16>, vector<256x256xbf16>, vector<8x256xf32> -> vector<8x256xf32>
    %c40 = arith.constant 40 : index
    %c0_23 = arith.constant 0 : index
    %44 = vector.load %arg3[%c40, %c0_23] : memref<64x256xf32, #tpu.memory_space<vmem>>, vector<1x256xf32>
    %45 = vector.broadcast %44 : vector<1x256xf32> to vector<8x256xf32>
    %46 = arith.addf %43, %45 : vector<8x256xf32>
    %47 = arith.addf %23, %46 : vector<8x256xf32>
    %c1280 = arith.constant 1280 : index
    %c0_24 = arith.constant 0 : index
    %48 = vector.load %arg2[%c1280, %c0_24] : memref<1664x256xbf16, #tpu.memory_space<vmem>>, vector<128x256xbf16>
    %cst_25 = arith.constant dense<0.000000e+00> : vector<8x256xf32>
    %49 = tpu.matmul %0, %48, %cst_25 {dimension_numbers = #tpu.dot_dimension_numbers<[1], [0], [0], [1], [0, 0, 1, 1], [], []>} : vector<8x128xbf16>, vector<128x256xbf16>, vector<8x256xf32> -> vector<8x256xf32>
    %c48 = arith.constant 48 : index
    %c0_26 = arith.constant 0 : index
    %50 = vector.load %arg3[%c48, %c0_26] : memref<64x256xf32, #tpu.memory_space<vmem>>, vector<1x256xf32>
    %51 = vector.broadcast %50 : vector<1x256xf32> to vector<8x256xf32>
    %52 = arith.addf %49, %51 : vector<8x256xf32>
    %cst_27 = arith.constant 1.000000e-01 : f32
    %53 = vector.broadcast %cst_27 : f32 to vector<8x256xf32>
    %54 = arith.mulf %53, %52 : vector<8x256xf32>
    %55 = arith.maximumf %52, %54 : vector<8x256xf32>
    %56 = arith.truncf %55 : vector<8x256xf32> to vector<8x256xbf16>
    %c1408 = arith.constant 1408 : index
    %c0_28 = arith.constant 0 : index
    %57 = vector.load %arg2[%c1408, %c0_28] : memref<1664x256xbf16, #tpu.memory_space<vmem>>, vector<256x256xbf16>
    %cst_29 = arith.constant dense<0.000000e+00> : vector<8x256xf32>
    %58 = tpu.matmul %56, %57, %cst_29 {dimension_numbers = #tpu.dot_dimension_numbers<[1], [0], [0], [1], [0, 0, 1, 1], [], []>} : vector<8x256xbf16>, vector<256x256xbf16>, vector<8x256xf32> -> vector<8x256xf32>
    %c56 = arith.constant 56 : index
    %c0_30 = arith.constant 0 : index
    %59 = vector.load %arg3[%c56, %c0_30] : memref<64x256xf32, #tpu.memory_space<vmem>>, vector<1x256xf32>
    %60 = vector.broadcast %59 : vector<1x256xf32> to vector<8x256xf32>
    %61 = arith.addf %58, %60 : vector<8x256xf32>
    %62 = arith.addf %47, %61 : vector<8x256xf32>
    %cst_31 = arith.constant 1.000000e-01 : f32
    %63 = vector.broadcast %cst_31 : f32 to vector<8x256xf32>
    %64 = arith.mulf %63, %62 : vector<8x256xf32>
    %65 = arith.maximumf %62, %64 : vector<8x256xf32>
    %66 = arith.truncf %65 : vector<8x256xf32> to vector<8x256xbf16>
    %c0_32 = arith.constant 0 : index
    %c0_33 = arith.constant 0 : index
    %67 = vector.load %arg6[%c0_32, %c0_33] : memref<256x128xbf16, #tpu.memory_space<vmem>>, vector<256x128xbf16>
    %cst_34 = arith.constant dense<0.000000e+00> : vector<8x128xf32>
    %68 = tpu.matmul %66, %67, %cst_34 {dimension_numbers = #tpu.dot_dimension_numbers<[1], [0], [0], [1], [0, 0, 1, 1], [], []>} : vector<8x256xbf16>, vector<256x128xbf16>, vector<8x128xf32> -> vector<8x128xf32>
    %c0_35 = arith.constant 0 : index
    %c0_36 = arith.constant 0 : index
    %69 = vector.load %arg4[%c0_35, %c0_36] : memref<640x128xbf16, #tpu.memory_space<vmem>>, vector<128x128xbf16>
    %cst_37 = arith.constant dense<0.000000e+00> : vector<8x128xf32>
    %70 = tpu.matmul %0, %69, %cst_37 {dimension_numbers = #tpu.dot_dimension_numbers<[1], [0], [0], [1], [0, 0, 1, 1], [], []>} : vector<8x128xbf16>, vector<128x128xbf16>, vector<8x128xf32> -> vector<8x128xf32>
    %c0_38 = arith.constant 0 : index
    %c0_39 = arith.constant 0 : index
    %71 = vector.load %arg5[%c0_38, %c0_39] : memref<64x128xf32, #tpu.memory_space<vmem>>, vector<1x128xf32>
    %72 = vector.broadcast %71 : vector<1x128xf32> to vector<8x128xf32>
    %73 = arith.addf %70, %72 : vector<8x128xf32>
    %cst_40 = arith.constant 1.000000e-01 : f32
    %74 = vector.broadcast %cst_40 : f32 to vector<8x128xf32>
    %75 = arith.mulf %74, %73 : vector<8x128xf32>
    %76 = arith.maximumf %73, %75 : vector<8x128xf32>
    %77 = tpu.iota {dimensions = array<i32: 1>} : vector<1x128xi32>
    %cst_41 = arith.constant dense<0.000000e+00> : vector<8xf32>
    %78 = vector.multi_reduction <add>, %76, %cst_41 [1] : vector<8x128xf32> to vector<8xf32>
    %79 = vector.shape_cast %78 : vector<8xf32> to vector<8x1xf32>
    %cst_42 = arith.constant 1.250000e-01 : f32
    %80 = vector.broadcast %cst_42 : f32 to vector<8x1xf32>
    %81 = arith.mulf %79, %80 : vector<8x1xf32>
    %82 = vector.broadcast %81 : vector<8x1xf32> to vector<8x128xf32>
    %83 = arith.subf %76, %82 : vector<8x128xf32>
    %c8_i32 = arith.constant 8 : i32
    %84 = vector.broadcast %c8_i32 : i32 to vector<1x128xi32>
    %85 = arith.cmpi slt, %77, %84 : vector<1x128xi32>
    %cst_43 = arith.constant 0.000000e+00 : f32
    %86 = vector.shape_cast %85 : vector<1x128xi1> to vector<1x128xi1>
    %87 = vector.broadcast %86 : vector<1x128xi1> to vector<8x128xi1>
    %88 = vector.broadcast %cst_43 : f32 to vector<8x128xf32>
    %89 = arith.select %87, %83, %88 : vector<8x128xi1>, vector<8x128xf32>
    %90 = arith.mulf %89, %89 : vector<8x128xf32>
    %cst_44 = arith.constant dense<0.000000e+00> : vector<8xf32>
    %91 = vector.multi_reduction <add>, %90, %cst_44 [1] : vector<8x128xf32> to vector<8xf32>
    %92 = vector.shape_cast %91 : vector<8xf32> to vector<8x1xf32>
    %cst_45 = arith.constant 1.250000e-01 : f32
    %93 = vector.broadcast %cst_45 : f32 to vector<8x1xf32>
    %94 = arith.mulf %92, %93 : vector<8x1xf32>
    %cst_46 = arith.constant 9.99999974E-6 : f32
    %95 = vector.broadcast %cst_46 : f32 to vector<8x1xf32>
    %96 = arith.addf %94, %95 : vector<8x1xf32>
    %97 = math.rsqrt %96 : vector<8x1xf32>
    %98 = vector.broadcast %97 : vector<8x1xf32> to vector<8x128xf32>
    %99 = arith.mulf %83, %98 : vector<8x128xf32>
    %c8_47 = arith.constant 8 : index
    %c0_48 = arith.constant 0 : index
    %100 = vector.load %arg5[%c8_47, %c0_48] : memref<64x128xf32, #tpu.memory_space<vmem>>, vector<1x128xf32>
    %101 = vector.broadcast %100 : vector<1x128xf32> to vector<8x128xf32>
    %102 = arith.mulf %99, %101 : vector<8x128xf32>
    %c16_49 = arith.constant 16 : index
    %c0_50 = arith.constant 0 : index
    %103 = vector.load %arg5[%c16_49, %c0_50] : memref<64x128xf32, #tpu.memory_space<vmem>>, vector<1x128xf32>
    %104 = vector.broadcast %103 : vector<1x128xf32> to vector<8x128xf32>
    %105 = arith.addf %102, %104 : vector<8x128xf32>
    %106 = arith.truncf %105 : vector<8x128xf32> to vector<8x128xbf16>
    %c128_51 = arith.constant 128 : index
    %c0_52 = arith.constant 0 : index
    %107 = vector.load %arg4[%c128_51, %c0_52] : memref<640x128xbf16, #tpu.memory_space<vmem>>, vector<128x128xbf16>
    %cst_53 = arith.constant dense<0.000000e+00> : vector<8x128xf32>
    %108 = tpu.matmul %106, %107, %cst_53 {dimension_numbers = #tpu.dot_dimension_numbers<[1], [0], [0], [1], [0, 0, 1, 1], [], []>} : vector<8x128xbf16>, vector<128x128xbf16>, vector<8x128xf32> -> vector<8x128xf32>
    %c24_54 = arith.constant 24 : index
    %c0_55 = arith.constant 0 : index
    %109 = vector.load %arg5[%c24_54, %c0_55] : memref<64x128xf32, #tpu.memory_space<vmem>>, vector<1x128xf32>
    %110 = vector.broadcast %109 : vector<1x128xf32> to vector<8x128xf32>
    %111 = arith.addf %108, %110 : vector<8x128xf32>
    %cst_56 = arith.constant 1.000000e-01 : f32
    %112 = vector.broadcast %cst_56 : f32 to vector<8x128xf32>
    %113 = arith.mulf %112, %111 : vector<8x128xf32>
    %114 = arith.maximumf %111, %113 : vector<8x128xf32>
    %c32_57 = arith.constant 32 : index
    %c0_58 = arith.constant 0 : index
    %115 = vector.load %arg5[%c32_57, %c0_58] : memref<64x128xf32, #tpu.memory_space<vmem>>, vector<1x128xf32>
    %116 = vector.broadcast %115 : vector<1x128xf32> to vector<8x128xf32>
    %117 = arith.addf %68, %116 : vector<8x128xf32>
    %118 = arith.addf %114, %117 : vector<8x128xf32>
    %119 = arith.truncf %118 : vector<8x128xf32> to vector<8x128xbf16>
    %c256 = arith.constant 256 : index
    %c0_59 = arith.constant 0 : index
    %120 = vector.load %arg4[%c256, %c0_59] : memref<640x128xbf16, #tpu.memory_space<vmem>>, vector<128x128xbf16>
    %cst_60 = arith.constant dense<0.000000e+00> : vector<8x128xf32>
    %121 = tpu.matmul %119, %120, %cst_60 {dimension_numbers = #tpu.dot_dimension_numbers<[1], [0], [0], [1], [0, 0, 1, 1], [], []>} : vector<8x128xbf16>, vector<128x128xbf16>, vector<8x128xf32> -> vector<8x128xf32>
    %c40_61 = arith.constant 40 : index
    %c0_62 = arith.constant 0 : index
    %122 = vector.load %arg5[%c40_61, %c0_62] : memref<64x128xf32, #tpu.memory_space<vmem>>, vector<1x128xf32>
    %123 = vector.broadcast %122 : vector<1x128xf32> to vector<8x128xf32>
    %124 = arith.addf %121, %123 : vector<8x128xf32>
    %cst_63 = arith.constant 1.000000e-01 : f32
    %125 = vector.broadcast %cst_63 : f32 to vector<8x128xf32>
    %126 = arith.mulf %125, %124 : vector<8x128xf32>
    %127 = arith.maximumf %124, %126 : vector<8x128xf32>
    %128 = arith.truncf %76 : vector<8x128xf32> to vector<8x128xbf16>
    %c384_64 = arith.constant 384 : index
    %c0_65 = arith.constant 0 : index
    %129 = vector.load %arg4[%c384_64, %c0_65] : memref<640x128xbf16, #tpu.memory_space<vmem>>, vector<128x128xbf16>
    %cst_66 = arith.constant dense<0.000000e+00> : vector<8x128xf32>
    %130 = tpu.matmul %128, %129, %cst_66 {dimension_numbers = #tpu.dot_dimension_numbers<[1], [0], [0], [1], [0, 0, 1, 1], [], []>} : vector<8x128xbf16>, vector<128x128xbf16>, vector<8x128xf32> -> vector<8x128xf32>
    %c48_67 = arith.constant 48 : index
    %c0_68 = arith.constant 0 : index
    %131 = vector.load %arg5[%c48_67, %c0_68] : memref<64x128xf32, #tpu.memory_space<vmem>>, vector<1x128xf32>
    %132 = vector.broadcast %131 : vector<1x128xf32> to vector<8x128xf32>
    %133 = arith.addf %130, %132 : vector<8x128xf32>
    %cst_69 = arith.constant 1.000000e-01 : f32
    %134 = vector.broadcast %cst_69 : f32 to vector<8x128xf32>
    %135 = arith.mulf %134, %133 : vector<8x128xf32>
    %136 = arith.maximumf %133, %135 : vector<8x128xf32>
    %137 = arith.addf %127, %136 : vector<8x128xf32>
    %138 = arith.truncf %137 : vector<8x128xf32> to vector<8x128xbf16>
    %c512 = arith.constant 512 : index
    %c0_70 = arith.constant 0 : index
    %139 = vector.load %arg4[%c512, %c0_70] : memref<640x128xbf16, #tpu.memory_space<vmem>>, vector<128x128xbf16>
    %cst_71 = arith.constant dense<0.000000e+00> : vector<8x128xf32>
    %140 = tpu.matmul %138, %139, %cst_71 {dimension_numbers = #tpu.dot_dimension_numbers<[1], [0], [0], [1], [0, 0, 1, 1], [], []>} : vector<8x128xbf16>, vector<128x128xbf16>, vector<8x128xf32> -> vector<8x128xf32>
    %c56_72 = arith.constant 56 : index
    %c0_73 = arith.constant 0 : index
    %141 = vector.load %arg5[%c56_72, %c0_73] : memref<64x128xf32, #tpu.memory_space<vmem>>, vector<1x128xf32>
    %142 = vector.broadcast %141 : vector<1x128xf32> to vector<8x128xf32>
    %143 = arith.addf %140, %142 : vector<8x128xf32>
    %cst_74 = arith.constant 1.000000e-01 : f32
    %144 = vector.broadcast %cst_74 : f32 to vector<8x128xf32>
    %145 = arith.mulf %144, %143 : vector<8x128xf32>
    %146 = arith.maximumf %143, %145 : vector<8x128xf32>
    %147 = arith.truncf %146 : vector<8x128xf32> to vector<8x128xbf16>
    %c0_75 = arith.constant 0 : index
    %c0_76 = arith.constant 0 : index
    %148 = vector.load %arg7[%c0_75, %c0_76] : memref<8x128xbf16, #tpu.memory_space<vmem>>, vector<8x128xbf16>
    tpu.vector_store %arg7[%c0_75, %c0_76], %147 {strides = array<i32>} : memref<8x128xbf16, #tpu.memory_space<vmem>>, vector<8x128xbf16>,
    return
  }
  func.func @transform_0(%arg0: i32) -> (i32, i32) {
    %c0_i32 = arith.constant 0 : i32
    %c0_i32_0 = arith.constant 0 : i32
    return %arg0, %c0_i32 : i32, i32
  }
  func.func @transform_1(%arg0: i32) -> (i32, i32) {
    %c0_i32 = arith.constant 0 : i32
    %c0_i32_0 = arith.constant 0 : i32
    %c0_i32_1 = arith.constant 0 : i32
    return %c0_i32, %c0_i32_0 : i32, i32
  }
  func.func @transform_2(%arg0: i32) -> (i32, i32) {
    %c0_i32 = arith.constant 0 : i32
    %c0_i32_0 = arith.constant 0 : i32
    %c0_i32_1 = arith.constant 0 : i32
    return %c0_i32, %c0_i32_0 : i32, i32
  }
  func.func @transform_3(%arg0: i32) -> (i32, i32) {
    %c0_i32 = arith.constant 0 : i32
    %c0_i32_0 = arith.constant 0 : i32
    %c0_i32_1 = arith.constant 0 : i32
    return %c0_i32, %c0_i32_0 : i32, i32
  }
  func.func @transform_4(%arg0: i32) -> (i32, i32) {
    %c0_i32 = arith.constant 0 : i32
    %c0_i32_0 = arith.constant 0 : i32
    %c0_i32_1 = arith.constant 0 : i32
    return %c0_i32, %c0_i32_0 : i32, i32
  }
  func.func @transform_5(%arg0: i32) -> (i32, i32) {
    %c0_i32 = arith.constant 0 : i32
    %c0_i32_0 = arith.constant 0 : i32
    %c0_i32_1 = arith.constant 0 : i32
    return %c0_i32, %c0_i32_0 : i32, i32
  }
  func.func @transform_6(%arg0: i32) -> (i32, i32) {
    %c0_i32 = arith.constant 0 : i32
    %c0_i32_0 = arith.constant 0 : i32
    return %arg0, %c0_i32 : i32, i32
  }
}

</mosaic_0001>

<llo_original>
// kernel: tpu_custom_call.1
$region0: #{tpu_custom_call.1}
  #allocation0 [shape = 'u32[]', space=smem, size = 0x4, offset = 0x4, fixed_abs, tag = 'smem constant byte address 0x4 - core index']
  #allocation1 [shape = 'u32[144,128]{1,0:T(1,128)}', space=vmem, size = 0x12000, scoped, tag = 'internal scratch']
  %s0 = inlined_call_operand.hbm [shape: bf16[8,128], index: 0, kind: input, shape index: {}]
  %s1 = inlined_call_operand.hbm [shape: bf16[1664,256], index: 1, kind: input, shape index: {}]
  %s2 = inlined_call_operand.hbm [shape: f32[64,256], index: 2, kind: input, shape index: {}]
  %s3 = inlined_call_operand.hbm [shape: bf16[640,128], index: 3, kind: input, shape index: {}]
  %s4 = inlined_call_operand.hbm [shape: f32[64,128], index: 4, kind: input, shape index: {}]
  %s5 = inlined_call_operand.hbm [shape: bf16[256,128], index: 5, kind: input, shape index: {}]
  %s6 = inlined_call_operand.hbm [shape: bf16[8,128], index: 6, kind: output, shape index: {}]
  %s7 = sld [smem:[#allocation0]]
  $region58: #{tpu_custom_call.1} parent=0
    _
  %s9 = ssub.s32 1, %s7
  %s10 = scalar_select 0, %s9, %s7
  $region1: #{tpu_custom_call.1} parent=0
    #allocation2 [shape = 'u8[2048]{0}', space=vmem, size = 0x800, scoped, tag = 'input window, operand 0, single buffered']
    #allocation3 [shape = 's32[1]{0}', space=sflag, size = 0x4, scoped, tag = 'scoped memory for tpu_custom_call.1']
    #allocation4 [shape = 's32[1]{0}', space=sflag, size = 0x4, scoped, tag = 'scoped memory for tpu_custom_call.1']
    #allocation5 [shape = 'u8[851968]{0}', space=vmem, size = 0xd0000, scoped, tag = 'input window, operand 1, single buffered']
    #allocation6 [shape = 's32[1]{0}', space=sflag, size = 0x4, scoped, tag = 'scoped memory for tpu_custom_call.1']
    #allocation7 [shape = 'u8[65536]{0}', space=vmem, size = 0x10000, scoped, tag = 'input window, operand 2, single buffered']
    #allocation8 [shape = 'u8[163840]{0}', space=vmem, size = 0x28000, scoped, tag = 'input window, operand 3, single buffered']
    #allocation9 [shape = 's32[1]{0}', space=sflag, size = 0x4, scoped, tag = 'scoped memory for tpu_custom_call.1']
    #allocation10 [shape = 'u8[32768]{0}', space=vmem, size = 0x8000, scoped, tag = 'input window, operand 4, single buffered']
    #allocation11 [shape = 'u8[65536]{0}', space=vmem, size = 0x10000, scoped, tag = 'input window, operand 5, single buffered']
    #allocation12 [shape = 's32[1]{0}', space=sflag, size = 0x4, scoped, tag = 'scoped memory for tpu_custom_call.1']
    #allocation13 [shape = 'u8[2048]{0}', space=vmem, size = 0x800, scoped, tag = 'output window, operand 0, single buffered']
    %11 = vsyncpa [#allocation3], 0
    %12 = vsyncpa [#allocation6], 0
    %13 = vsyncpa [#allocation9], 0
    %14 = vsyncpa [#allocation12], 0
    %15 = vsyncpa [#allocation4], 0
    // Predicated region
    $region2: #{tpu_custom_call.1} parent=1 // pred_check
      _
    $region3: #{tpu_custom_call.1} parent=1 // pred_check_branch
      %17 = sbr.rel (0) target = $region5
    $region4: #{tpu_custom_call.1} parent=1 // pred_region
      %s19 = ssub.s32 64, 64
      %20 = vsyncadd [#allocation3], %s19
      %s22 = sshll.u32 [#allocation2], 4
      %s23 = int_to_ptr.vmem [resolvable:$true] %s22
      %25 = dma.hbm_to_vmem [thread:$0]  %s0, 64, %s23, [#allocation3]
    $region5: #{tpu_custom_call.1} parent=1 // pred_fallthru
      _
    // Predicated region
    $region6: #{tpu_custom_call.1} parent=1 // pred_check
      _
    $region7: #{tpu_custom_call.1} parent=1 // pred_check_branch
      %27 = sbr.rel (0) target = $region9
    $region8: #{tpu_custom_call.1} parent=1 // pred_region
      %s29 = ssub.s32 26624, 26624
      %30 = vsyncadd [#allocation6], %s29
      %s31 = sshll.u32 [#allocation5], 4
      %s32 = int_to_ptr.vmem [resolvable:$true] %s31
      %37 = dma.hbm_to_vmem [thread:$0]  %s1, 26624, %s32, [#allocation6], 128, 128, 8
    $region9: #{tpu_custom_call.1} parent=1 // pred_fallthru
      _
    // Predicated region
    $region10: #{tpu_custom_call.1} parent=1 // pred_check
      _
    $region11: #{tpu_custom_call.1} parent=1 // pred_check_branch
      %39 = sbr.rel (0) target = $region13
    $region12: #{tpu_custom_call.1} parent=1 // pred_region
      %s41 = ssub.s32 2048, 2048
      %42 = vsyncadd [#allocation6], %s41
      %s43 = sshll.u32 [#allocation7], 4
      %s44 = int_to_ptr.vmem [resolvable:$true] %s43
      %49 = dma.hbm_to_vmem [thread:$0]  %s2, 2048, %s44, [#allocation6], 256, 256, 16
    $region13: #{tpu_custom_call.1} parent=1 // pred_fallthru
      _
    // Predicated region
    $region14: #{tpu_custom_call.1} parent=1 // pred_check
      _
    $region15: #{tpu_custom_call.1} parent=1 // pred_check_branch
      %51 = sbr.rel (0) target = $region17
    $region16: #{tpu_custom_call.1} parent=1 // pred_region
      %s53 = ssub.s32 5120, 5120
      %54 = vsyncadd [#allocation9], %s53
      %s55 = sshll.u32 [#allocation8], 4
      %s56 = int_to_ptr.vmem [resolvable:$true] %s55
      %61 = dma.hbm_to_vmem [thread:$0]  %s3, 5120, %s56, [#allocation9], 64, 64, 4
    $region17: #{tpu_custom_call.1} parent=1 // pred_fallthru
      _
    // Predicated region
    $region18: #{tpu_custom_call.1} parent=1 // pred_check
      _
    $region19: #{tpu_custom_call.1} parent=1 // pred_check_branch
      %63 = sbr.rel (0) target = $region21
    $region20: #{tpu_custom_call.1} parent=1 // pred_region
      %s65 = ssub.s32 1024, 1024
      %66 = vsyncadd [#allocation9], %s65
      %s67 = sshll.u32 [#allocation10], 4
      %s68 = int_to_ptr.vmem [resolvable:$true] %s67
      %73 = dma.hbm_to_vmem [thread:$0]  %s4, 1024, %s68, [#allocation9], 128, 128, 8
    $region21: #{tpu_custom_call.1} parent=1 // pred_fallthru
      _
    // Predicated region
    $region22: #{tpu_custom_call.1} parent=1 // pred_check
      _
    $region23: #{tpu_custom_call.1} parent=1 // pred_check_branch
      %75 = sbr.rel (0) target = $region25
    $region24: #{tpu_custom_call.1} parent=1 // pred_region
      %s77 = ssub.s32 2048, 2048
      %78 = vsyncadd [#allocation12], %s77
      %s79 = sshll.u32 [#allocation11], 4
      %s80 = int_to_ptr.vmem [resolvable:$true] %s79
      %85 = dma.hbm_to_vmem [thread:$0]  %s5, 2048, %s80, [#allocation12], 64, 64, 4
    $region25: #{tpu_custom_call.1} parent=1 // pred_fallthru
      _
    // Predicated region
    $region26: #{tpu_custom_call.1} parent=1 // pred_check
      _
    $region27: #{tpu_custom_call.1} parent=1 // pred_check_branch
      %87 = sbr.rel (0) target = $region29
    $region28: #{tpu_custom_call.1} parent=1 // pred_region
      %88 = dma.done [#allocation3], 64
    $region29: #{tpu_custom_call.1} parent=1 // pred_fallthru
      _
    // Predicated region
    $region30: #{tpu_custom_call.1} parent=1 // pred_check
      _
    $region31: #{tpu_custom_call.1} parent=1 // pred_check_branch
      %90 = sbr.rel (0) target = $region33
    $region32: #{tpu_custom_call.1} parent=1 // pred_region
      %91 = dma.done [#allocation6], 26624
    $region33: #{tpu_custom_call.1} parent=1 // pred_fallthru
      _
    // Predicated region
    $region34: #{tpu_custom_call.1} parent=1 // pred_check
      _
    $region35: #{tpu_custom_call.1} parent=1 // pred_check_branch
      %93 = sbr.rel (0) target = $region37
    $region36: #{tpu_custom_call.1} parent=1 // pred_region
      %94 = dma.done [#allocation6], 2048
    $region37: #{tpu_custom_call.1} parent=1 // pred_fallthru
      _
    // Predicated region
    $region38: #{tpu_custom_call.1} parent=1 // pred_check
      _
    $region39: #{tpu_custom_call.1} parent=1 // pred_check_branch
      %96 = sbr.rel (0) target = $region41
    $region40: #{tpu_custom_call.1} parent=1 // pred_region
      %97 = dma.done [#allocation9], 5120
    $region41: #{tpu_custom_call.1} parent=1 // pred_fallthru
      _
    // Predicated region
    $region42: #{tpu_custom_call.1} parent=1 // pred_check
      _
    $region43: #{tpu_custom_call.1} parent=1 // pred_check_branch
      %99 = sbr.rel (0) target = $region45
    $region44: #{tpu_custom_call.1} parent=1 // pred_region
      %100 = dma.done [#allocation9], 1024
    $region45: #{tpu_custom_call.1} parent=1 // pred_fallthru
      _
    // Predicated region
    $region46: #{tpu_custom_call.1} parent=1 // pred_check
      _
    $region47: #{tpu_custom_call.1} parent=1 // pred_check_branch
      %102 = sbr.rel (0) target = $region49
    $region48: #{tpu_custom_call.1} parent=1 // pred_region
      %103 = dma.done [#allocation12], 2048
    $region49: #{tpu_custom_call.1} parent=1 // pred_fallthru
      _
    %v105 = vld [vmem:[#allocation2] sm:$0xf]
    %v106 = vld [vmem:[#allocation5] sm:$0xff]
    %v107 = vld [vmem:[#allocation5 + $0x8] sm:$0xff]
    %v108 = vld [vmem:[#allocation5 + $0x10] sm:$0xff]
    %v109 = vld [vmem:[#allocation5 + $0x18] sm:$0xff]
    %v110 = vld [vmem:[#allocation5 + $0x20] sm:$0xff]
    %v111 = vld [vmem:[#allocation5 + $0x28] sm:$0xff]
    %v112 = vld [vmem:[#allocation5 + $0x30] sm:$0xff]
    %v113 = vld [vmem:[#allocation5 + $0x38] sm:$0xff]
    %v114 = vld [vmem:[#allocation5 + $0x40] sm:$0xff]
    %v115 = vld [vmem:[#allocation5 + $0x48] sm:$0xff]
    %v116 = vld [vmem:[#allocation5 + $0x50] sm:$0xff]
    %v117 = vld [vmem:[#allocation5 + $0x58] sm:$0xff]
    %v118 = vld [vmem:[#allocation5 + $0x60] sm:$0xff]
    %v119 = vld [vmem:[#allocation5 + $0x68] sm:$0xff]
    %v120 = vld [vmem:[#allocation5 + $0x70] sm:$0xff]
    %v121 = vld [vmem:[#allocation5 + $0x78] sm:$0xff]
    %v122 = vld [vmem:[#allocation7] ss:$8 sm:$0x3]
    %v124 = vlaneseq
    %v125 = vshrl.u32 %v124, 7
    %v126 = vsub.s32 0, %v125
    %v127 = vrot.slane %v122, %v126
    %v128 = vlaneseq
    %v129 = vshrl.u32 %v128, 7
    %v130 = vsub.s32 1, %v129
    %v131 = vrot.slane %v122, %v130
    %v150 = vunpack.c.l.b16 %v106
    %v151 = vunpack.c.h.b16 %v106
    %v152 = vunpack.c.l.b16 %v107
    %v153 = vunpack.c.h.b16 %v107
    %v154 = vunpack.c.l.b16 %v108
    %v155 = vunpack.c.h.b16 %v108
    %v156 = vunpack.c.l.b16 %v109
    %v157 = vunpack.c.h.b16 %v109
    %v158 = vunpack.c.l.b16 %v110
    %v159 = vunpack.c.h.b16 %v110
    %v160 = vunpack.c.l.b16 %v111
    %v161 = vunpack.c.h.b16 %v111
    %v162 = vunpack.c.l.b16 %v112
    %v163 = vunpack.c.h.b16 %v112
    %v164 = vunpack.c.l.b16 %v113
    %v165 = vunpack.c.h.b16 %v113
    %v166 = vunpack.c.l.b16 %v114
    %v167 = vunpack.c.h.b16 %v114
    %v168 = vunpack.c.l.b16 %v115
    %v169 = vunpack.c.h.b16 %v115
    %v170 = vunpack.c.l.b16 %v116
    %v171 = vunpack.c.h.b16 %v116
    %v172 = vunpack.c.l.b16 %v117
    %v173 = vunpack.c.h.b16 %v117
    %v174 = vunpack.c.l.b16 %v118
    %v175 = vunpack.c.h.b16 %v118
    %v176 = vunpack.c.l.b16 %v119
    %v177 = vunpack.c.h.b16 %v119
    %v178 = vunpack.c.l.b16 %v120
    %v179 = vunpack.c.h.b16 %v120
    %v180 = vunpack.c.l.b16 %v121
    %v181 = vunpack.c.h.b16 %v121
    %v182 = vpack.c.b16 %v152, %v150
    %v183 = vpack.c.b16 %v153, %v151
    %v184 = vpack.c.b16 %v156, %v154
    %v185 = vpack.c.b16 %v157, %v155
    %v186 = vpack.c.b16 %v160, %v158
    %v187 = vpack.c.b16 %v161, %v159
    %v188 = vpack.c.b16 %v164, %v162
    %v189 = vpack.c.b16 %v165, %v163
    %v190 = vpack.c.b16 %v168, %v166
    %v191 = vpack.c.b16 %v169, %v167
    %v192 = vpack.c.b16 %v172, %v170
    %v193 = vpack.c.b16 %v173, %v171
    %v194 = vpack.c.b16 %v176, %v174
    %v195 = vpack.c.b16 %v177, %v175
    %v196 = vpack.c.b16 %v180, %v178
    %v197 = vpack.c.b16 %v181, %v179
    %214 = vmatprep.subr.bf16.mxu0 %v197
    %215 = vmatpush1.bf16.msra.mxu0 %v196
    %216 = vmatprep.subr.bf16.mxu0 %v195
    %217 = vmatpush1.bf16.msra.mxu0 %v194
    %218 = vmatprep.subr.bf16.mxu0 %v193
    %219 = vmatpush1.bf16.msra.mxu0 %v192
    %220 = vmatprep.subr.bf16.mxu0 %v191
    %221 = vmatpush1.bf16.msra.mxu0 %v190
    %222 = vmatprep.subr.bf16.mxu0 %v189
    %223 = vmatpush1.bf16.msra.mxu0 %v188
    %224 = vmatprep.subr.bf16.mxu0 %v187
    %225 = vmatpush1.bf16.msra.mxu0 %v186
    %226 = vmatprep.subr.bf16.mxu0 %v185
    %227 = vmatpush1.bf16.msra.mxu0 %v184
    %228 = vmatprep.subr.bf16.mxu0 %v183
    %229 = vmatpush1.bf16.msra.mxu0 %v182
    %230 = vmatprep.subr.bf16.mxu0 0
    %231 = vmatpush2.bf16.msra.mxu0 0
    %232 = vmatprep.subr.bf16.mxu0 0
    %233 = vmatpush2.bf16.msra.mxu0 0
    %234 = vmatprep.subr.bf16.mxu0 0
    %235 = vmatpush2.bf16.msra.mxu0 0
    %236 = vmatprep.subr.bf16.mxu0 0
    %237 = vmatpush2.bf16.msra.mxu0 0
    %238 = vmatprep.subr.bf16.mxu0 0
    %239 = vmatpush2.bf16.msra.mxu0 0
    %240 = vmatprep.subr.bf16.mxu0 0
    %241 = vmatpush2.bf16.msra.mxu0 0
    %242 = vmatprep.subr.bf16.mxu0 0
    %243 = vmatpush2.bf16.msra.mxu0 0
    %244 = vmatprep.subr.bf16.mxu0 0
    %245 = vmatpush2.bf16.msra.mxu0 0
    %246 = vmatprep.mubr.bf16.mxu0 0
    %247 = vmatmul.mubr.bf16.gmra.mxu0 %v105
    %v248 = vpop.f32.mrf.mxu0
    %v249 = vadd.f32 %v127, %v248
    %v250 = vpop.f32.mrf.mxu0
    %v251 = vadd.f32 %v131, %v250
    %v252 = vpop.f32.mrf.mxu0
    %v253 = vpop.f32.mrf.mxu0
    %254 = vdwg.mxu0
    %v255 = vmul.f32 %v249, 0.1
    %v256 = vmul.f32 %v251, 0.1
    %v257 = vmax.f32 %v249, %v255
    %v258 = vmax.f32 %v251, %v256
    %v259 = vpack.c.bf16 %v257, %v257
    %v260 = vpack.c.bf16 %v258, %v258
    %v261 = vld [vmem:[#allocation5 + $0x80] sm:$0xff]
    %v262 = vld [vmem:[#allocation5 + $0x88] sm:$0xff]
    %v263 = vld [vmem:[#allocation5 + $0x90] sm:$0xff]
    %v264 = vld [vmem:[#allocation5 + $0x98] sm:$0xff]
    %v265 = vld [vmem:[#allocation5 + $0xa0] sm:$0xff]
    %v266 = vld [vmem:[#allocation5 + $0xa8] sm:$0xff]
    %v267 = vld [vmem:[#allocation5 + $0xb0] sm:$0xff]
    %v268 = vld [vmem:[#allocation5 + $0xb8] sm:$0xff]
    %v269 = vld [vmem:[#allocation5 + $0xc0] sm:$0xff]
    %v270 = vld [vmem:[#allocation5 + $0xc8] sm:$0xff]
    %v271 = vld [vmem:[#allocation5 + $0xd0] sm:$0xff]
    %v272 = vld [vmem:[#allocation5 + $0xd8] sm:$0xff]
    %v273 = vld [vmem:[#allocation5 + $0xe0] sm:$0xff]
    %v274 = vld [vmem:[#allocation5 + $0xe8] sm:$0xff]
    %v275 = vld [vmem:[#allocation5 + $0xf0] sm:$0xff]
    %v276 = vld [vmem:[#allocation5 + $0xf8] sm:$0xff]
    %v277 = vld [vmem:[#allocation5 + $0x100] sm:$0xff]
    %v278 = vld [vmem:[#allocation5 + $0x108] sm:$0xff]
    %v279 = vld [vmem:[#allocation5 + $0x110] sm:$0xff]
    %v280 = vld [vmem:[#allocation5 + $0x118] sm:$0xff]
    %v281 = vld [vmem:[#allocation5 + $0x120] sm:$0xff]
    %v282 = vld [vmem:[#allocation5 + $0x128] sm:$0xff]
    %v283 = vld [vmem:[#allocation5 + $0x130] sm:$0xff]
    %v284 = vld [vmem:[#allocation5 + $0x138] sm:$0xff]
    %v285 = vld [vmem:[#allocation5 + $0x140] sm:$0xff]
    %v286 = vld [vmem:[#allocation5 + $0x148] sm:$0xff]
    %v287 = vld [vmem:[#allocation5 + $0x150] sm:$0xff]
    %v288 = vld [vmem:[#allocation5 + $0x158] sm:$0xff]
    %v289 = vld [vmem:[#allocation5 + $0x160] sm:$0xff]
    %v290 = vld [vmem:[#allocation5 + $0x168] sm:$0xff]
    %v291 = vld [vmem:[#allocation5 + $0x170] sm:$0xff]
    %v292 = vld [vmem:[#allocation5 + $0x178] sm:$0xff]
    %s293 = scalar_lea.vmem [#allocation7], 16
    %v294 = vld [vmem:[%s293] ss:$8 sm:$0x3]
    %v296 = vlaneseq
    %v297 = vshrl.u32 %v296, 7
    %v298 = vsub.s32 0, %v297
    %v299 = vrot.slane %v294, %v298
    %v300 = vlaneseq
    %v301 = vshrl.u32 %v300, 7
    %v302 = vsub.s32 1, %v301
    %v303 = vrot.slane %v294, %v302
    %v338 = vunpack.c.l.b16 %v261
    %v339 = vunpack.c.h.b16 %v261
    %v340 = vunpack.c.l.b16 %v262
    %v341 = vunpack.c.h.b16 %v262
    %v342 = vunpack.c.l.b16 %v263
    %v343 = vunpack.c.h.b16 %v263
    %v344 = vunpack.c.l.b16 %v264
    %v345 = vunpack.c.h.b16 %v264
    %v346 = vunpack.c.l.b16 %v265
    %v347 = vunpack.c.h.b16 %v265
    %v348 = vunpack.c.l.b16 %v266
    %v349 = vunpack.c.h.b16 %v266
    %v350 = vunpack.c.l.b16 %v267
    %v351 = vunpack.c.h.b16 %v267
    %v352 = vunpack.c.l.b16 %v268
    %v353 = vunpack.c.h.b16 %v268
    %v354 = vunpack.c.l.b16 %v269
    %v355 = vunpack.c.h.b16 %v269
    %v356 = vunpack.c.l.b16 %v270
    %v357 = vunpack.c.h.b16 %v270
    %v358 = vunpack.c.l.b16 %v271
    %v359 = vunpack.c.h.b16 %v271
    %v360 = vunpack.c.l.b16 %v272
    %v361 = vunpack.c.h.b16 %v272
    %v362 = vunpack.c.l.b16 %v273
    %v363 = vunpack.c.h.b16 %v273
    %v364 = vunpack.c.l.b16 %v274
    %v365 = vunpack.c.h.b16 %v274
    %v366 = vunpack.c.l.b16 %v275
    %v367 = vunpack.c.h.b16 %v275
    %v368 = vunpack.c.l.b16 %v276
    %v369 = vunpack.c.h.b16 %v276
    %v370 = vunpack.c.l.b16 %v277
    %v371 = vunpack.c.h.b16 %v277
    %v372 = vunpack.c.l.b16 %v278
    %v373 = vunpack.c.h.b16 %v278
    %v374 = vunpack.c.l.b16 %v279
    %v375 = vunpack.c.h.b16 %v279
    %v376 = vunpack.c.l.b16 %v280
    %v377 = vunpack.c.h.b16 %v280
    %v378 = vunpack.c.l.b16 %v281
    %v379 = vunpack.c.h.b16 %v281
    %v380 = vunpack.c.l.b16 %v282
    %v381 = vunpack.c.h.b16 %v282
    %v382 = vunpack.c.l.b16 %v283
    %v383 = vunpack.c.h.b16 %v283
    %v384 = vunpack.c.l.b16 %v284
    %v385 = vunpack.c.h.b16 %v284
    %v386 = vunpack.c.l.b16 %v285
    %v387 = vunpack.c.h.b16 %v285
    %v388 = vunpack.c.l.b16 %v286
    %v389 = vunpack.c.h.b16 %v286
    %v390 = vunpack.c.l.b16 %v287
    %v391 = vunpack.c.h.b16 %v287
    %v392 = vunpack.c.l.b16 %v288
    %v393 = vunpack.c.h.b16 %v288
    %v394 = vunpack.c.l.b16 %v289
    %v395 = vunpack.c.h.b16 %v289
    %v396 = vunpack.c.l.b16 %v290
    %v397 = vunpack.c.h.b16 %v290
    %v398 = vunpack.c.l.b16 %v291
    %v399 = vunpack.c.h.b16 %v291
    %v400 = vunpack.c.l.b16 %v292
    %v401 = vunpack.c.h.b16 %v292
    %v402 = vpack.c.b16 %v340, %v338
    %v403 = vpack.c.b16 %v341, %v339
    %v404 = vpack.c.b16 %v344, %v342
    %v405 = vpack.c.b16 %v345, %v343
    %v406 = vpack.c.b16 %v348, %v346
    %v407 = vpack.c.b16 %v349, %v347
    %v408 = vpack.c.b16 %v352, %v350
    %v409 = vpack.c.b16 %v353, %v351
    %v410 = vpack.c.b16 %v356, %v354
    %v411 = vpack.c.b16 %v357, %v355
    %v412 = vpack.c.b16 %v360, %v358
    %v413 = vpack.c.b16 %v361, %v359
    %v414 = vpack.c.b16 %v364, %v362
    %v415 = vpack.c.b16 %v365, %v363
    %v416 = vpack.c.b16 %v368, %v366
    %v417 = vpack.c.b16 %v369, %v367
    %v418 = vpack.c.b16 %v372, %v370
    %v419 = vpack.c.b16 %v373, %v371
    %v420 = vpack.c.b16 %v376, %v374
    %v421 = vpack.c.b16 %v377, %v375
    %v422 = vpack.c.b16 %v380, %v378
    %v423 = vpack.c.b16 %v381, %v379
    %v424 = vpack.c.b16 %v384, %v382
    %v425 = vpack.c.b16 %v385, %v383
    %v426 = vpack.c.b16 %v388, %v386
    %v427 = vpack.c.b16 %v389, %v387
    %v428 = vpack.c.b16 %v392, %v390
    %v429 = vpack.c.b16 %v393, %v391
    %v430 = vpack.c.b16 %v396, %v394
    %v431 = vpack.c.b16 %v397, %v395
    %v432 = vpack.c.b16 %v400, %v398
    %v433 = vpack.c.b16 %v401, %v399
    %466 = vmatprep.subr.bf16.mxu0 %v417
    %467 = vmatpush1.bf16.msra.mxu0 %v416
    %468 = vmatprep.subr.bf16.mxu0 %v415
    %469 = vmatpush1.bf16.msra.mxu0 %v414
    %470 = vmatprep.subr.bf16.mxu0 %v413
    %471 = vmatpush1.bf16.msra.mxu0 %v412
    %472 = vmatprep.subr.bf16.mxu0 %v411
    %473 = vmatpush1.bf16.msra.mxu0 %v410
    %474 = vmatprep.subr.bf16.mxu0 %v409
    %475 = vmatpush1.bf16.msra.mxu0 %v408
    %476 = vmatprep.subr.bf16.mxu0 %v407
    %477 = vmatpush1.bf16.msra.mxu0 %v406
    %478 = vmatprep.subr.bf16.mxu0 %v405
    %479 = vmatpush1.bf16.msra.mxu0 %v404
    %480 = vmatprep.subr.bf16.mxu0 %v403
    %481 = vmatpush1.bf16.msra.mxu0 %v402
    %482 = vmatprep.subr.bf16.mxu0 %v433
    %483 = vmatpush2.bf16.msra.mxu0 %v432
    %484 = vmatprep.subr.bf16.mxu0 %v431
    %485 = vmatpush2.bf16.msra.mxu0 %v430
    %486 = vmatprep.subr.bf16.mxu0 %v429
    %487 = vmatpush2.bf16.msra.mxu0 %v428
    %488 = vmatprep.subr.bf16.mxu0 %v427
    %489 = vmatpush2.bf16.msra.mxu0 %v426
    %490 = vmatprep.subr.bf16.mxu0 %v425
    %491 = vmatpush2.bf16.msra.mxu0 %v424
    %492 = vmatprep.subr.bf16.mxu0 %v423
    %493 = vmatpush2.bf16.msra.mxu0 %v422
    %494 = vmatprep.subr.bf16.mxu0 %v421
    %495 = vmatpush2.bf16.msra.mxu0 %v420
    %496 = vmatprep.subr.bf16.mxu0 %v419
    %497 = vmatpush2.bf16.msra.mxu0 %v418
    %498 = vmatprep.mubr.bf16.mxu0 %v260
    %499 = vmatmul.mubr.bf16.gmra.mxu0 %v259
    %v500 = vpop.f32.mrf.mxu0
    %v501 = vadd.f32 %v299, %v500
    %v502 = vpop.f32.mrf.mxu0
    %v503 = vadd.f32 %v303, %v502
    %v504 = vpop.f32.mrf.mxu0
    %v505 = vpop.f32.mrf.mxu0
    %506 = vdwg.mxu0
    %v507 = vmul.f32 %v501, 0.1
    %v508 = vmul.f32 %v503, 0.1
    %v509 = vmax.f32 %v501, %v507
    %v510 = vmax.f32 %v503, %v508
    %v511 = vpack.c.bf16 %v509, %v509
    %v512 = vpack.c.bf16 %v510, %v510
    %v513 = vld [vmem:[#allocation5 + $0x180] sm:$0xff]
    %v514 = vld [vmem:[#allocation5 + $0x188] sm:$0xff]
    %v515 = vld [vmem:[#allocation5 + $0x190] sm:$0xff]
    %v516 = vld [vmem:[#allocation5 + $0x198] sm:$0xff]
    %v517 = vld [vmem:[#allocation5 + $0x1a0] sm:$0xff]
    %v518 = vld [vmem:[#allocation5 + $0x1a8] sm:$0xff]
    %v519 = vld [vmem:[#allocation5 + $0x1b0] sm:$0xff]
    %v520 = vld [vmem:[#allocation5 + $0x1b8] sm:$0xff]
    %v521 = vld [vmem:[#allocation5 + $0x1c0] sm:$0xff]
    %v522 = vld [vmem:[#allocation5 + $0x1c8] sm:$0xff]
    %v523 = vld [vmem:[#allocation5 + $0x1d0] sm:$0xff]
    %v524 = vld [vmem:[#allocation5 + $0x1d8] sm:$0xff]
    %v525 = vld [vmem:[#allocation5 + $0x1e0] sm:$0xff]
    %v526 = vld [vmem:[#allocation5 + $0x1e8] sm:$0xff]
    %v527 = vld [vmem:[#allocation5 + $0x1f0] sm:$0xff]
    %v528 = vld [vmem:[#allocation5 + $0x1f8] sm:$0xff]
    %v529 = vld [vmem:[#allocation5 + $0x200] sm:$0xff]
    %v530 = vld [vmem:[#allocation5 + $0x208] sm:$0xff]
    %v531 = vld [vmem:[#allocation5 + $0x210] sm:$0xff]
    %v532 = vld [vmem:[#allocation5 + $0x218] sm:$0xff]
    %v533 = vld [vmem:[#allocation5 + $0x220] sm:$0xff]
    %v534 = vld [vmem:[#allocation5 + $0x228] sm:$0xff]
    %v535 = vld [vmem:[#allocation5 + $0x230] sm:$0xff]
    %v536 = vld [vmem:[#allocation5 + $0x238] sm:$0xff]
    %v537 = vld [vmem:[#allocation5 + $0x240] sm:$0xff]
    %v538 = vld [vmem:[#allocation5 + $0x248] sm:$0xff]
    %v539 = vld [vmem:[#allocation5 + $0x250] sm:$0xff]
    %v540 = vld [vmem:[#allocation5 + $0x258] sm:$0xff]
    %v541 = vld [vmem:[#allocation5 + $0x260] sm:$0xff]
    %v542 = vld [vmem:[#allocation5 + $0x268] sm:$0xff]
    %v543 = vld [vmem:[#allocation5 + $0x270] sm:$0xff]
    %v544 = vld [vmem:[#allocation5 + $0x278] sm:$0xff]
    %s545 = scalar_lea.vmem [#allocation7], 32
    %v546 = vld [vmem:[%s545] ss:$8 sm:$0x3]
    %v548 = vlaneseq
    %v549 = vshrl.u32 %v548, 7
    %v550 = vsub.s32 0, %v549
    %v551 = vrot.slane %v546, %v550
    %v552 = vlaneseq
    %v553 = vshrl.u32 %v552, 7
    %v554 = vsub.s32 1, %v553
    %v555 = vrot.slane %v546, %v554
    %v590 = vunpack.c.l.b16 %v513
    %v591 = vunpack.c.h.b16 %v513
    %v592 = vunpack.c.l.b16 %v514
    %v593 = vunpack.c.h.b16 %v514
    %v594 = vunpack.c.l.b16 %v515
    %v595 = vunpack.c.h.b16 %v515
    %v596 = vunpack.c.l.b16 %v516
    %v597 = vunpack.c.h.b16 %v516
    %v598 = vunpack.c.l.b16 %v517
    %v599 = vunpack.c.h.b16 %v517
    %v600 = vunpack.c.l.b16 %v518
    %v601 = vunpack.c.h.b16 %v518
    %v602 = vunpack.c.l.b16 %v519
    %v603 = vunpack.c.h.b16 %v519
    %v604 = vunpack.c.l.b16 %v520
    %v605 = vunpack.c.h.b16 %v520
    %v606 = vunpack.c.l.b16 %v521
    %v607 = vunpack.c.h.b16 %v521
    %v608 = vunpack.c.l.b16 %v522
    %v609 = vunpack.c.h.b16 %v522
    %v610 = vunpack.c.l.b16 %v523
    %v611 = vunpack.c.h.b16 %v523
    %v612 = vunpack.c.l.b16 %v524
    %v613 = vunpack.c.h.b16 %v524
    %v614 = vunpack.c.l.b16 %v525
    %v615 = vunpack.c.h.b16 %v525
    %v616 = vunpack.c.l.b16 %v526
    %v617 = vunpack.c.h.b16 %v526
    %v618 = vunpack.c.l.b16 %v527
    %v619 = vunpack.c.h.b16 %v527
    %v620 = vunpack.c.l.b16 %v528
    %v621 = vunpack.c.h.b16 %v528
    %v622 = vunpack.c.l.b16 %v529
    %v623 = vunpack.c.h.b16 %v529
    %v624 = vunpack.c.l.b16 %v530
    %v625 = vunpack.c.h.b16 %v530
    %v626 = vunpack.c.l.b16 %v531
    %v627 = vunpack.c.h.b16 %v531
    %v628 = vunpack.c.l.b16 %v532
    %v629 = vunpack.c.h.b16 %v532
    %v630 = vunpack.c.l.b16 %v533
    %v631 = vunpack.c.h.b16 %v533
    %v632 = vunpack.c.l.b16 %v534
    %v633 = vunpack.c.h.b16 %v534
    %v634 = vunpack.c.l.b16 %v535
    %v635 = vunpack.c.h.b16 %v535
    %v636 = vunpack.c.l.b16 %v536
    %v637 = vunpack.c.h.b16 %v536
    %v638 = vunpack.c.l.b16 %v537
    %v639 = vunpack.c.h.b16 %v537
    %v640 = vunpack.c.l.b16 %v538
    %v641 = vunpack.c.h.b16 %v538
    %v642 = vunpack.c.l.b16 %v539
    %v643 = vunpack.c.h.b16 %v539
    %v644 = vunpack.c.l.b16 %v540
    %v645 = vunpack.c.h.b16 %v540
    %v646 = vunpack.c.l.b16 %v541
    %v647 = vunpack.c.h.b16 %v541
    %v648 = vunpack.c.l.b16 %v542
    %v649 = vunpack.c.h.b16 %v542
    %v650 = vunpack.c.l.b16 %v543
    %v651 = vunpack.c.h.b16 %v543
    %v652 = vunpack.c.l.b16 %v544
    %v653 = vunpack.c.h.b16 %v544
    %v654 = vpack.c.b16 %v592, %v590
    %v655 = vpack.c.b16 %v593, %v591
    %v656 = vpack.c.b16 %v596, %v594
    %v657 = vpack.c.b16 %v597, %v595
    %v658 = vpack.c.b16 %v600, %v598
    %v659 = vpack.c.b16 %v601, %v599
    %v660 = vpack.c.b16 %v604, %v602
    %v661 = vpack.c.b16 %v605, %v603
    %v662 = vpack.c.b16 %v608, %v606
    %v663 = vpack.c.b16 %v609, %v607
    %v664 = vpack.c.b16 %v612, %v610
    %v665 = vpack.c.b16 %v613, %v611
    %v666 = vpack.c.b16 %v616, %v614
    %v667 = vpack.c.b16 %v617, %v615
    %v668 = vpack.c.b16 %v620, %v618
    %v669 = vpack.c.b16 %v621, %v619
    %v670 = vpack.c.b16 %v624, %v622
    %v671 = vpack.c.b16 %v625, %v623
    %v672 = vpack.c.b16 %v628, %v626
    %v673 = vpack.c.b16 %v629, %v627
    %v674 = vpack.c.b16 %v632, %v630
    %v675 = vpack.c.b16 %v633, %v631
    %v676 = vpack.c.b16 %v636, %v634
    %v677 = vpack.c.b16 %v637, %v635
    %v678 = vpack.c.b16 %v640, %v638
    %v679 = vpack.c.b16 %v641, %v639
    %v680 = vpack.c.b16 %v644, %v642
    %v681 = vpack.c.b16 %v645, %v643
    %v682 = vpack.c.b16 %v648, %v646
    %v683 = vpack.c.b16 %v649, %v647
    %v684 = vpack.c.b16 %v652, %v650
    %v685 = vpack.c.b16 %v653, %v651
    %718 = vmatprep.subr.bf16.mxu0 %v669
    %719 = vmatpush1.bf16.msra.mxu0 %v668
    %720 = vmatprep.subr.bf16.mxu0 %v667
    %721 = vmatpush1.bf16.msra.mxu0 %v666
    %722 = vmatprep.subr.bf16.mxu0 %v665
    %723 = vmatpush1.bf16.msra.mxu0 %v664
    %724 = vmatprep.subr.bf16.mxu0 %v663
    %725 = vmatpush1.bf16.msra.mxu0 %v662
    %726 = vmatprep.subr.bf16.mxu0 %v661
    %727 = vmatpush1.bf16.msra.mxu0 %v660
    %728 = vmatprep.subr.bf16.mxu0 %v659
    %729 = vmatpush1.bf16.msra.mxu0 %v658
    %730 = vmatprep.subr.bf16.mxu0 %v657
    %731 = vmatpush1.bf16.msra.mxu0 %v656
    %732 = vmatprep.subr.bf16.mxu0 %v655
    %733 = vmatpush1.bf16.msra.mxu0 %v654
    %734 = vmatprep.subr.bf16.mxu0 %v685
    %735 = vmatpush2.bf16.msra.mxu0 %v684
    %736 = vmatprep.subr.bf16.mxu0 %v683
    %737 = vmatpush2.bf16.msra.mxu0 %v682
    %738 = vmatprep.subr.bf16.mxu0 %v681
    %739 = vmatpush2.bf16.msra.mxu0 %v680
    %740 = vmatprep.subr.bf16.mxu0 %v679
    %741 = vmatpush2.bf16.msra.mxu0 %v678
    %742 = vmatprep.subr.bf16.mxu0 %v677
    %743 = vmatpush2.bf16.msra.mxu0 %v676
    %744 = vmatprep.subr.bf16.mxu0 %v675
    %745 = vmatpush2.bf16.msra.mxu0 %v674
    %746 = vmatprep.subr.bf16.mxu0 %v673
    %747 = vmatpush2.bf16.msra.mxu0 %v672
    %748 = vmatprep.subr.bf16.mxu0 %v671
    %749 = vmatpush2.bf16.msra.mxu0 %v670
    %750 = vmatprep.mubr.bf16.mxu0 %v512
    %751 = vmatmul.mubr.bf16.gmra.mxu0 %v511
    %v752 = vpop.f32.mrf.mxu0
    %v753 = vadd.f32 %v551, %v752
    %v754 = vpop.f32.mrf.mxu0
    %v755 = vadd.f32 %v555, %v754
    %v756 = vpop.f32.mrf.mxu0
    %v757 = vpop.f32.mrf.mxu0
    %758 = vdwg.mxu0
    %v759 = vld [vmem:[#allocation5 + $0x280] sm:$0xff]
    %v760 = vld [vmem:[#allocation5 + $0x288] sm:$0xff]
    %v761 = vld [vmem:[#allocation5 + $0x290] sm:$0xff]
    %v762 = vld [vmem:[#allocation5 + $0x298] sm:$0xff]
    %v763 = vld [vmem:[#allocation5 + $0x2a0] sm:$0xff]
    %v764 = vld [vmem:[#allocation5 + $0x2a8] sm:$0xff]
    %v765 = vld [vmem:[#allocation5 + $0x2b0] sm:$0xff]
    %v766 = vld [vmem:[#allocation5 + $0x2b8] sm:$0xff]
    %v767 = vld [vmem:[#allocation5 + $0x2c0] sm:$0xff]
    %v768 = vld [vmem:[#allocation5 + $0x2c8] sm:$0xff]
    %v769 = vld [vmem:[#allocation5 + $0x2d0] sm:$0xff]
    %v770 = vld [vmem:[#allocation5 + $0x2d8] sm:$0xff]
    %v771 = vld [vmem:[#allocation5 + $0x2e0] sm:$0xff]
    %v772 = vld [vmem:[#allocation5 + $0x2e8] sm:$0xff]
    %v773 = vld [vmem:[#allocation5 + $0x2f0] sm:$0xff]
    %v774 = vld [vmem:[#allocation5 + $0x2f8] sm:$0xff]
    %s775 = scalar_lea.vmem [#allocation7], 48
    %v776 = vld [vmem:[%s775] ss:$8 sm:$0x3]
    %v778 = vlaneseq
    %v779 = vshrl.u32 %v778, 7
    %v780 = vsub.s32 0, %v779
    %v781 = vrot.slane %v776, %v780
    %v782 = vlaneseq
    %v783 = vshrl.u32 %v782, 7
    %v784 = vsub.s32 1, %v783
    %v785 = vrot.slane %v776, %v784
    %v804 = vunpack.c.l.b16 %v759
    %v805 = vunpack.c.h.b16 %v759
    %v806 = vunpack.c.l.b16 %v760
    %v807 = vunpack.c.h.b16 %v760
    %v808 = vunpack.c.l.b16 %v761
    %v809 = vunpack.c.h.b16 %v761
    %v810 = vunpack.c.l.b16 %v762
    %v811 = vunpack.c.h.b16 %v762
    %v812 = vunpack.c.l.b16 %v763
    %v813 = vunpack.c.h.b16 %v763
    %v814 = vunpack.c.l.b16 %v764
    %v815 = vunpack.c.h.b16 %v764
    %v816 = vunpack.c.l.b16 %v765
    %v817 = vunpack.c.h.b16 %v765
    %v818 = vunpack.c.l.b16 %v766
    %v819 = vunpack.c.h.b16 %v766
    %v820 = vunpack.c.l.b16 %v767
    %v821 = vunpack.c.h.b16 %v767
    %v822 = vunpack.c.l.b16 %v768
    %v823 = vunpack.c.h.b16 %v768
    %v824 = vunpack.c.l.b16 %v769
    %v825 = vunpack.c.h.b16 %v769
    %v826 = vunpack.c.l.b16 %v770
    %v827 = vunpack.c.h.b16 %v770
    %v828 = vunpack.c.l.b16 %v771
    %v829 = vunpack.c.h.b16 %v771
    %v830 = vunpack.c.l.b16 %v772
    %v831 = vunpack.c.h.b16 %v772
    %v832 = vunpack.c.l.b16 %v773
    %v833 = vunpack.c.h.b16 %v773
    %v834 = vunpack.c.l.b16 %v774
    %v835 = vunpack.c.h.b16 %v774
    %v836 = vpack.c.b16 %v806, %v804
    %v837 = vpack.c.b16 %v807, %v805
    %v838 = vpack.c.b16 %v810, %v808
    %v839 = vpack.c.b16 %v811, %v809
    %v840 = vpack.c.b16 %v814, %v812
    %v841 = vpack.c.b16 %v815, %v813
    %v842 = vpack.c.b16 %v818, %v816
    %v843 = vpack.c.b16 %v819, %v817
    %v844 = vpack.c.b16 %v822, %v820
    %v845 = vpack.c.b16 %v823, %v821
    %v846 = vpack.c.b16 %v826, %v824
    %v847 = vpack.c.b16 %v827, %v825
    %v848 = vpack.c.b16 %v830, %v828
    %v849 = vpack.c.b16 %v831, %v829
    %v850 = vpack.c.b16 %v834, %v832
    %v851 = vpack.c.b16 %v835, %v833
    %868 = vmatprep.subr.bf16.mxu0 %v851
    %869 = vmatpush1.bf16.msra.mxu0 %v850
    %870 = vmatprep.subr.bf16.mxu0 %v849
    %871 = vmatpush1.bf16.msra.mxu0 %v848
    %872 = vmatprep.subr.bf16.mxu0 %v847
    %873 = vmatpush1.bf16.msra.mxu0 %v846
    %874 = vmatprep.subr.bf16.mxu0 %v845
    %875 = vmatpush1.bf16.msra.mxu0 %v844
    %876 = vmatprep.subr.bf16.mxu0 %v843
    %877 = vmatpush1.bf16.msra.mxu0 %v842
    %878 = vmatprep.subr.bf16.mxu0 %v841
    %879 = vmatpush1.bf16.msra.mxu0 %v840
    %880 = vmatprep.subr.bf16.mxu0 %v839
    %881 = vmatpush1.bf16.msra.mxu0 %v838
    %882 = vmatprep.subr.bf16.mxu0 %v837
    %883 = vmatpush1.bf16.msra.mxu0 %v836
    %884 = vmatprep.subr.bf16.mxu0 0
    %885 = vmatpush2.bf16.msra.mxu0 0
    %886 = vmatprep.subr.bf16.mxu0 0
    %887 = vmatpush2.bf16.msra.mxu0 0
    %888 = vmatprep.subr.bf16.mxu0 0
    %889 = vmatpush2.bf16.msra.mxu0 0
    %890 = vmatprep.subr.bf16.mxu0 0
    %891 = vmatpush2.bf16.msra.mxu0 0
    %892 = vmatprep.subr.bf16.mxu0 0
    %893 = vmatpush2.bf16.msra.mxu0 0
    %894 = vmatprep.subr.bf16.mxu0 0
    %895 = vmatpush2.bf16.msra.mxu0 0
    %896 = vmatprep.subr.bf16.mxu0 0
    %897 = vmatpush2.bf16.msra.mxu0 0
    %898 = vmatprep.subr.bf16.mxu0 0
    %899 = vmatpush2.bf16.msra.mxu0 0
    %900 = vmatprep.mubr.bf16.mxu0 0
    %901 = vmatmul.mubr.bf16.gmra.mxu0 %v105
    %v902 = vpop.f32.mrf.mxu0
    %v903 = vadd.f32 %v781, %v902
    %v904 = vpop.f32.mrf.mxu0
    %v905 = vadd.f32 %v785, %v904
    %v906 = vpop.f32.mrf.mxu0
    %v907 = vpop.f32.mrf.mxu0
    %908 = vdwg.mxu0
    %v909 = vmul.f32 %v903, 0.1
    %v910 = vmul.f32 %v905, 0.1
    %v911 = vmax.f32 %v903, %v909
    %v912 = vmax.f32 %v905, %v910
    %v913 = vpack.c.bf16 %v911, %v911
    %v914 = vpack.c.bf16 %v912, %v912
    %v915 = vld [vmem:[#allocation5 + $0x300] sm:$0xff]
    %v916 = vld [vmem:[#allocation5 + $0x308] sm:$0xff]
    %v917 = vld [vmem:[#allocation5 + $0x310] sm:$0xff]
    %v918 = vld [vmem:[#allocation5 + $0x318] sm:$0xff]
    %v919 = vld [vmem:[#allocation5 + $0x320] sm:$0xff]
    %v920 = vld [vmem:[#allocation5 + $0x328] sm:$0xff]
    %v921 = vld [vmem:[#allocation5 + $0x330] sm:$0xff]
    %v922 = vld [vmem:[#allocation5 + $0x338] sm:$0xff]
    %v923 = vld [vmem:[#allocation5 + $0x340] sm:$0xff]
    %v924 = vld [vmem:[#allocation5 + $0x348] sm:$0xff]
    %v925 = vld [vmem:[#allocation5 + $0x350] sm:$0xff]
    %v926 = vld [vmem:[#allocation5 + $0x358] sm:$0xff]
    %v927 = vld [vmem:[#allocation5 + $0x360] sm:$0xff]
    %v928 = vld [vmem:[#allocation5 + $0x368] sm:$0xff]
    %v929 = vld [vmem:[#allocation5 + $0x370] sm:$0xff]
    %v930 = vld [vmem:[#allocation5 + $0x378] sm:$0xff]
    %v931 = vld [vmem:[#allocation5 + $0x380] sm:$0xff]
    %v932 = vld [vmem:[#allocation5 + $0x388] sm:$0xff]
    %v933 = vld [vmem:[#allocation5 + $0x390] sm:$0xff]
    %v934 = vld [vmem:[#allocation5 + $0x398] sm:$0xff]
    %v935 = vld [vmem:[#allocation5 + $0x3a0] sm:$0xff]
    %v936 = vld [vmem:[#allocation5 + $0x3a8] sm:$0xff]
    %v937 = vld [vmem:[#allocation5 + $0x3b0] sm:$0xff]
    %v938 = vld [vmem:[#allocation5 + $0x3b8] sm:$0xff]
    %v939 = vld [vmem:[#allocation5 + $0x3c0] sm:$0xff]
    %v940 = vld [vmem:[#allocation5 + $0x3c8] sm:$0xff]
    %v941 = vld [vmem:[#allocation5 + $0x3d0] sm:$0xff]
    %v942 = vld [vmem:[#allocation5 + $0x3d8] sm:$0xff]
    %v943 = vld [vmem:[#allocation5 + $0x3e0] sm:$0xff]
    %v944 = vld [vmem:[#allocation5 + $0x3e8] sm:$0xff]
    %v945 = vld [vmem:[#allocation5 + $0x3f0] sm:$0xff]
    %v946 = vld [vmem:[#allocation5 + $0x3f8] sm:$0xff]
    %s947 = scalar_lea.vmem [#allocation7], 64
    %v948 = vld [vmem:[%s947] ss:$8 sm:$0x3]
    %v950 = vlaneseq
    %v951 = vshrl.u32 %v950, 7
    %v952 = vsub.s32 0, %v951
    %v953 = vrot.slane %v948, %v952
    %v954 = vlaneseq
    %v955 = vshrl.u32 %v954, 7
    %v956 = vsub.s32 1, %v955
    %v957 = vrot.slane %v948, %v956
    %v992 = vunpack.c.l.b16 %v915
    %v993 = vunpack.c.h.b16 %v915
    %v994 = vunpack.c.l.b16 %v916
    %v995 = vunpack.c.h.b16 %v916
    %v996 = vunpack.c.l.b16 %v917
    %v997 = vunpack.c.h.b16 %v917
    %v998 = vunpack.c.l.b16 %v918
    %v999 = vunpack.c.h.b16 %v918
    %v1000 = vunpack.c.l.b16 %v919
    %v1001 = vunpack.c.h.b16 %v919
    %v1002 = vunpack.c.l.b16 %v920
    %v1003 = vunpack.c.h.b16 %v920
    %v1004 = vunpack.c.l.b16 %v921
    %v1005 = vunpack.c.h.b16 %v921
    %v1006 = vunpack.c.l.b16 %v922
    %v1007 = vunpack.c.h.b16 %v922
    %v1008 = vunpack.c.l.b16 %v923
    %v1009 = vunpack.c.h.b16 %v923
    %v1010 = vunpack.c.l.b16 %v924
    %v1011 = vunpack.c.h.b16 %v924
    %v1012 = vunpack.c.l.b16 %v925
    %v1013 = vunpack.c.h.b16 %v925
    %v1014 = vunpack.c.l.b16 %v926
    %v1015 = vunpack.c.h.b16 %v926
    %v1016 = vunpack.c.l.b16 %v927
    %v1017 = vunpack.c.h.b16 %v927
    %v1018 = vunpack.c.l.b16 %v928
    %v1019 = vunpack.c.h.b16 %v928
    %v1020 = vunpack.c.l.b16 %v929
    %v1021 = vunpack.c.h.b16 %v929
    %v1022 = vunpack.c.l.b16 %v930
    %v1023 = vunpack.c.h.b16 %v930
    %v1024 = vunpack.c.l.b16 %v931
    %v1025 = vunpack.c.h.b16 %v931
    %v1026 = vunpack.c.l.b16 %v932
    %v1027 = vunpack.c.h.b16 %v932
    %v1028 = vunpack.c.l.b16 %v933
    %v1029 = vunpack.c.h.b16 %v933
    %v1030 = vunpack.c.l.b16 %v934
    %v1031 = vunpack.c.h.b16 %v934
    %v1032 = vunpack.c.l.b16 %v935
    %v1033 = vunpack.c.h.b16 %v935
    %v1034 = vunpack.c.l.b16 %v936
    %v1035 = vunpack.c.h.b16 %v936
    %v1036 = vunpack.c.l.b16 %v937
    %v1037 = vunpack.c.h.b16 %v937
    %v1038 = vunpack.c.l.b16 %v938
    %v1039 = vunpack.c.h.b16 %v938
    %v1040 = vunpack.c.l.b16 %v939
    %v1041 = vunpack.c.h.b16 %v939
    %v1042 = vunpack.c.l.b16 %v940
    %v1043 = vunpack.c.h.b16 %v940
    %v1044 = vunpack.c.l.b16 %v941
    %v1045 = vunpack.c.h.b16 %v941
    %v1046 = vunpack.c.l.b16 %v942
    %v1047 = vunpack.c.h.b16 %v942
    %v1048 = vunpack.c.l.b16 %v943
    %v1049 = vunpack.c.h.b16 %v943
    %v1050 = vunpack.c.l.b16 %v944
    %v1051 = vunpack.c.h.b16 %v944
    %v1052 = vunpack.c.l.b16 %v945
    %v1053 = vunpack.c.h.b16 %v945
    %v1054 = vunpack.c.l.b16 %v946
    %v1055 = vunpack.c.h.b16 %v946
    %v1056 = vpack.c.b16 %v994, %v992
    %v1057 = vpack.c.b16 %v995, %v993
    %v1058 = vpack.c.b16 %v998, %v996
    %v1059 = vpack.c.b16 %v999, %v997
    %v1060 = vpack.c.b16 %v1002, %v1000
    %v1061 = vpack.c.b16 %v1003, %v1001
    %v1062 = vpack.c.b16 %v1006, %v1004
    %v1063 = vpack.c.b16 %v1007, %v1005
    %v1064 = vpack.c.b16 %v1010, %v1008
    %v1065 = vpack.c.b16 %v1011, %v1009
    %v1066 = vpack.c.b16 %v1014, %v1012
    %v1067 = vpack.c.b16 %v1015, %v1013
    %v1068 = vpack.c.b16 %v1018, %v1016
    %v1069 = vpack.c.b16 %v1019, %v1017
    %v1070 = vpack.c.b16 %v1022, %v1020
    %v1071 = vpack.c.b16 %v1023, %v1021
    %v1072 = vpack.c.b16 %v1026, %v1024
    %v1073 = vpack.c.b16 %v1027, %v1025
    %v1074 = vpack.c.b16 %v1030, %v1028
    %v1075 = vpack.c.b16 %v1031, %v1029
    %v1076 = vpack.c.b16 %v1034, %v1032
    %v1077 = vpack.c.b16 %v1035, %v1033
    %v1078 = vpack.c.b16 %v1038, %v1036
    %v1079 = vpack.c.b16 %v1039, %v1037
    %v1080 = vpack.c.b16 %v1042, %v1040
    %v1081 = vpack.c.b16 %v1043, %v1041
    %v1082 = vpack.c.b16 %v1046, %v1044
    %v1083 = vpack.c.b16 %v1047, %v1045
    %v1084 = vpack.c.b16 %v1050, %v1048
    %v1085 = vpack.c.b16 %v1051, %v1049
    %v1086 = vpack.c.b16 %v1054, %v1052
    %v1087 = vpack.c.b16 %v1055, %v1053
    %1120 = vmatprep.subr.bf16.mxu0 %v1071
    %1121 = vmatpush1.bf16.msra.mxu0 %v1070
    %1122 = vmatprep.subr.bf16.mxu0 %v1069
    %1123 = vmatpush1.bf16.msra.mxu0 %v1068
    %1124 = vmatprep.subr.bf16.mxu0 %v1067
    %1125 = vmatpush1.bf16.msra.mxu0 %v1066
    %1126 = vmatprep.subr.bf16.mxu0 %v1065
    %1127 = vmatpush1.bf16.msra.mxu0 %v1064
    %1128 = vmatprep.subr.bf16.mxu0 %v1063
    %1129 = vmatpush1.bf16.msra.mxu0 %v1062
    %1130 = vmatprep.subr.bf16.mxu0 %v1061
    %1131 = vmatpush1.bf16.msra.mxu0 %v1060
    %1132 = vmatprep.subr.bf16.mxu0 %v1059
    %1133 = vmatpush1.bf16.msra.mxu0 %v1058
    %1134 = vmatprep.subr.bf16.mxu0 %v1057
    %1135 = vmatpush1.bf16.msra.mxu0 %v1056
    %1136 = vmatprep.subr.bf16.mxu0 %v1087
    %1137 = vmatpush2.bf16.msra.mxu0 %v1086
    %1138 = vmatprep.subr.bf16.mxu0 %v1085
    %1139 = vmatpush2.bf16.msra.mxu0 %v1084
    %1140 = vmatprep.subr.bf16.mxu0 %v1083
    %1141 = vmatpush2.bf16.msra.mxu0 %v1082
    %1142 = vmatprep.subr.bf16.mxu0 %v1081
    %1143 = vmatpush2.bf16.msra.mxu0 %v1080
    %1144 = vmatprep.subr.bf16.mxu0 %v1079
    %1145 = vmatpush2.bf16.msra.mxu0 %v1078
    %1146 = vmatprep.subr.bf16.mxu0 %v1077
    %1147 = vmatpush2.bf16.msra.mxu0 %v1076
    %1148 = vmatprep.subr.bf16.mxu0 %v1075
    %1149 = vmatpush2.bf16.msra.mxu0 %v1074
    %1150 = vmatprep.subr.bf16.mxu0 %v1073
    %1151 = vmatpush2.bf16.msra.mxu0 %v1072
    %1152 = vmatprep.mubr.bf16.mxu0 %v914
    %1153 = vmatmul.mubr.bf16.gmra.mxu0 %v913
    %v1154 = vpop.f32.mrf.mxu0
    %v1155 = vadd.f32 %v953, %v1154
    %v1156 = vpop.f32.mrf.mxu0
    %v1157 = vadd.f32 %v957, %v1156
    %v1158 = vpop.f32.mrf.mxu0
    %v1159 = vpop.f32.mrf.mxu0
    %1160 = vdwg.mxu0
    %v1161 = vmul.f32 %v1155, 0.1
    %v1162 = vmul.f32 %v1157, 0.1
    %v1163 = vmax.f32 %v1155, %v1161
    %v1164 = vmax.f32 %v1157, %v1162
    %v1165 = vpack.c.bf16 %v1163, %v1163
    %v1166 = vpack.c.bf16 %v1164, %v1164
    %v1167 = vld [vmem:[#allocation5 + $0x400] sm:$0xff]
    %v1168 = vld [vmem:[#allocation5 + $0x408] sm:$0xff]
    %v1169 = vld [vmem:[#allocation5 + $0x410] sm:$0xff]
    %v1170 = vld [vmem:[#allocation5 + $0x418] sm:$0xff]
    %v1171 = vld [vmem:[#allocation5 + $0x420] sm:$0xff]
    %v1172 = vld [vmem:[#allocation5 + $0x428] sm:$0xff]
    %v1173 = vld [vmem:[#allocation5 + $0x430] sm:$0xff]
    %v1174 = vld [vmem:[#allocation5 + $0x438] sm:$0xff]
    %v1175 = vld [vmem:[#allocation5 + $0x440] sm:$0xff]
    %v1176 = vld [vmem:[#allocation5 + $0x448] sm:$0xff]
    %v1177 = vld [vmem:[#allocation5 + $0x450] sm:$0xff]
    %v1178 = vld [vmem:[#allocation5 + $0x458] sm:$0xff]
    %v1179 = vld [vmem:[#allocation5 + $0x460] sm:$0xff]
    %v1180 = vld [vmem:[#allocation5 + $0x468] sm:$0xff]
    %v1181 = vld [vmem:[#allocation5 + $0x470] sm:$0xff]
    %v1182 = vld [vmem:[#allocation5 + $0x478] sm:$0xff]
    %v1183 = vld [vmem:[#allocation5 + $0x480] sm:$0xff]
    %v1184 = vld [vmem:[#allocation5 + $0x488] sm:$0xff]
    %v1185 = vld [vmem:[#allocation5 + $0x490] sm:$0xff]
    %v1186 = vld [vmem:[#allocation5 + $0x498] sm:$0xff]
    %v1187 = vld [vmem:[#allocation5 + $0x4a0] sm:$0xff]
    %v1188 = vld [vmem:[#allocation5 + $0x4a8] sm:$0xff]
    %v1189 = vld [vmem:[#allocation5 + $0x4b0] sm:$0xff]
    %v1190 = vld [vmem:[#allocation5 + $0x4b8] sm:$0xff]
    %v1191 = vld [vmem:[#allocation5 + $0x4c0] sm:$0xff]
    %v1192 = vld [vmem:[#allocation5 + $0x4c8] sm:$0xff]
    %v1193 = vld [vmem:[#allocation5 + $0x4d0] sm:$0xff]
    %v1194 = vld [vmem:[#allocation5 + $0x4d8] sm:$0xff]
    %v1195 = vld [vmem:[#allocation5 + $0x4e0] sm:$0xff]
    %v1196 = vld [vmem:[#allocation5 + $0x4e8] sm:$0xff]
    %v1197 = vld [vmem:[#allocation5 + $0x4f0] sm:$0xff]
    %v1198 = vld [vmem:[#allocation5 + $0x4f8] sm:$0xff]
    %s1199 = scalar_lea.vmem [#allocation7], 80
    %v1200 = vld [vmem:[%s1199] ss:$8 sm:$0x3]
    %v1202 = vlaneseq
    %v1203 = vshrl.u32 %v1202, 7
    %v1204 = vsub.s32 0, %v1203
    %v1205 = vrot.slane %v1200, %v1204
    %v1206 = vlaneseq
    %v1207 = vshrl.u32 %v1206, 7
    %v1208 = vsub.s32 1, %v1207
    %v1209 = vrot.slane %v1200, %v1208
    %v1244 = vunpack.c.l.b16 %v1167
    %v1245 = vunpack.c.h.b16 %v1167
    %v1246 = vunpack.c.l.b16 %v1168
    %v1247 = vunpack.c.h.b16 %v1168
    %v1248 = vunpack.c.l.b16 %v1169
    %v1249 = vunpack.c.h.b16 %v1169
    %v1250 = vunpack.c.l.b16 %v1170
    %v1251 = vunpack.c.h.b16 %v1170
    %v1252 = vunpack.c.l.b16 %v1171
    %v1253 = vunpack.c.h.b16 %v1171
    %v1254 = vunpack.c.l.b16 %v1172
    %v1255 = vunpack.c.h.b16 %v1172
    %v1256 = vunpack.c.l.b16 %v1173
    %v1257 = vunpack.c.h.b16 %v1173
    %v1258 = vunpack.c.l.b16 %v1174
    %v1259 = vunpack.c.h.b16 %v1174
    %v1260 = vunpack.c.l.b16 %v1175
    %v1261 = vunpack.c.h.b16 %v1175
    %v1262 = vunpack.c.l.b16 %v1176
    %v1263 = vunpack.c.h.b16 %v1176
    %v1264 = vunpack.c.l.b16 %v1177
    %v1265 = vunpack.c.h.b16 %v1177
    %v1266 = vunpack.c.l.b16 %v1178
    %v1267 = vunpack.c.h.b16 %v1178
    %v1268 = vunpack.c.l.b16 %v1179
    %v1269 = vunpack.c.h.b16 %v1179
    %v1270 = vunpack.c.l.b16 %v1180
    %v1271 = vunpack.c.h.b16 %v1180
    %v1272 = vunpack.c.l.b16 %v1181
    %v1273 = vunpack.c.h.b16 %v1181
    %v1274 = vunpack.c.l.b16 %v1182
    %v1275 = vunpack.c.h.b16 %v1182
    %v1276 = vunpack.c.l.b16 %v1183
    %v1277 = vunpack.c.h.b16 %v1183
    %v1278 = vunpack.c.l.b16 %v1184
    %v1279 = vunpack.c.h.b16 %v1184
    %v1280 = vunpack.c.l.b16 %v1185
    %v1281 = vunpack.c.h.b16 %v1185
    %v1282 = vunpack.c.l.b16 %v1186
    %v1283 = vunpack.c.h.b16 %v1186
    %v1284 = vunpack.c.l.b16 %v1187
    %v1285 = vunpack.c.h.b16 %v1187
    %v1286 = vunpack.c.l.b16 %v1188
    %v1287 = vunpack.c.h.b16 %v1188
    %v1288 = vunpack.c.l.b16 %v1189
    %v1289 = vunpack.c.h.b16 %v1189
    %v1290 = vunpack.c.l.b16 %v1190
    %v1291 = vunpack.c.h.b16 %v1190
    %v1292 = vunpack.c.l.b16 %v1191
    %v1293 = vunpack.c.h.b16 %v1191
    %v1294 = vunpack.c.l.b16 %v1192
    %v1295 = vunpack.c.h.b16 %v1192
    %v1296 = vunpack.c.l.b16 %v1193
    %v1297 = vunpack.c.h.b16 %v1193
    %v1298 = vunpack.c.l.b16 %v1194
    %v1299 = vunpack.c.h.b16 %v1194
    %v1300 = vunpack.c.l.b16 %v1195
    %v1301 = vunpack.c.h.b16 %v1195
    %v1302 = vunpack.c.l.b16 %v1196
    %v1303 = vunpack.c.h.b16 %v1196
    %v1304 = vunpack.c.l.b16 %v1197
    %v1305 = vunpack.c.h.b16 %v1197
    %v1306 = vunpack.c.l.b16 %v1198
    %v1307 = vunpack.c.h.b16 %v1198
    %v1308 = vpack.c.b16 %v1246, %v1244
    %v1309 = vpack.c.b16 %v1247, %v1245
    %v1310 = vpack.c.b16 %v1250, %v1248
    %v1311 = vpack.c.b16 %v1251, %v1249
    %v1312 = vpack.c.b16 %v1254, %v1252
    %v1313 = vpack.c.b16 %v1255, %v1253
    %v1314 = vpack.c.b16 %v1258, %v1256
    %v1315 = vpack.c.b16 %v1259, %v1257
    %v1316 = vpack.c.b16 %v1262, %v1260
    %v1317 = vpack.c.b16 %v1263, %v1261
    %v1318 = vpack.c.b16 %v1266, %v1264
    %v1319 = vpack.c.b16 %v1267, %v1265
    %v1320 = vpack.c.b16 %v1270, %v1268
    %v1321 = vpack.c.b16 %v1271, %v1269
    %v1322 = vpack.c.b16 %v1274, %v1272
    %v1323 = vpack.c.b16 %v1275, %v1273
    %v1324 = vpack.c.b16 %v1278, %v1276
    %v1325 = vpack.c.b16 %v1279, %v1277
    %v1326 = vpack.c.b16 %v1282, %v1280
    %v1327 = vpack.c.b16 %v1283, %v1281
    %v1328 = vpack.c.b16 %v1286, %v1284
    %v1329 = vpack.c.b16 %v1287, %v1285
    %v1330 = vpack.c.b16 %v1290, %v1288
    %v1331 = vpack.c.b16 %v1291, %v1289
    %v1332 = vpack.c.b16 %v1294, %v1292
    %v1333 = vpack.c.b16 %v1295, %v1293
    %v1334 = vpack.c.b16 %v1298, %v1296
    %v1335 = vpack.c.b16 %v1299, %v1297
    %v1336 = vpack.c.b16 %v1302, %v1300
    %v1337 = vpack.c.b16 %v1303, %v1301
    %v1338 = vpack.c.b16 %v1306, %v1304
    %v1339 = vpack.c.b16 %v1307, %v1305
    %1372 = vmatprep.subr.bf16.mxu0 %v1323
    %1373 = vmatpush1.bf16.msra.mxu0 %v1322
    %1374 = vmatprep.subr.bf16.mxu0 %v1321
    %1375 = vmatpush1.bf16.msra.mxu0 %v1320
    %1376 = vmatprep.subr.bf16.mxu0 %v1319
    %1377 = vmatpush1.bf16.msra.mxu0 %v1318
    %1378 = vmatprep.subr.bf16.mxu0 %v1317
    %1379 = vmatpush1.bf16.msra.mxu0 %v1316
    %1380 = vmatprep.subr.bf16.mxu0 %v1315
    %1381 = vmatpush1.bf16.msra.mxu0 %v1314
    %1382 = vmatprep.subr.bf16.mxu0 %v1313
    %1383 = vmatpush1.bf16.msra.mxu0 %v1312
    %1384 = vmatprep.subr.bf16.mxu0 %v1311
    %1385 = vmatpush1.bf16.msra.mxu0 %v1310
    %1386 = vmatprep.subr.bf16.mxu0 %v1309
    %1387 = vmatpush1.bf16.msra.mxu0 %v1308
    %1388 = vmatprep.subr.bf16.mxu0 %v1339
    %1389 = vmatpush2.bf16.msra.mxu0 %v1338
    %1390 = vmatprep.subr.bf16.mxu0 %v1337
    %1391 = vmatpush2.bf16.msra.mxu0 %v1336
    %1392 = vmatprep.subr.bf16.mxu0 %v1335
    %1393 = vmatpush2.bf16.msra.mxu0 %v1334
    %1394 = vmatprep.subr.bf16.mxu0 %v1333
    %1395 = vmatpush2.bf16.msra.mxu0 %v1332
    %1396 = vmatprep.subr.bf16.mxu0 %v1331
    %1397 = vmatpush2.bf16.msra.mxu0 %v1330
    %1398 = vmatprep.subr.bf16.mxu0 %v1329
    %1399 = vmatpush2.bf16.msra.mxu0 %v1328
    %1400 = vmatprep.subr.bf16.mxu0 %v1327
    %1401 = vmatpush2.bf16.msra.mxu0 %v1326
    %1402 = vmatprep.subr.bf16.mxu0 %v1325
    %1403 = vmatpush2.bf16.msra.mxu0 %v1324
    %1404 = vmatprep.mubr.bf16.mxu0 %v1166
    %1405 = vmatmul.mubr.bf16.gmra.mxu0 %v1165
    %v1406 = vpop.f32.mrf.mxu0
    %v1407 = vadd.f32 %v1205, %v1406
    %v1408 = vpop.f32.mrf.mxu0
    %v1409 = vadd.f32 %v1209, %v1408
    %v1410 = vpop.f32.mrf.mxu0
    %v1411 = vpop.f32.mrf.mxu0
    %1412 = vdwg.mxu0
    %v1413 = vadd.f32 %v753, %v1407
    %v1414 = vadd.f32 %v755, %v1409
    %v1415 = vld [vmem:[#allocation5 + $0x500] sm:$0xff]
    %v1416 = vld [vmem:[#allocation5 + $0x508] sm:$0xff]
    %v1417 = vld [vmem:[#allocation5 + $0x510] sm:$0xff]
    %v1418 = vld [vmem:[#allocation5 + $0x518] sm:$0xff]
    %v1419 = vld [vmem:[#allocation5 + $0x520] sm:$0xff]
    %v1420 = vld [vmem:[#allocation5 + $0x528] sm:$0xff]
    %v1421 = vld [vmem:[#allocation5 + $0x530] sm:$0xff]
    %v1422 = vld [vmem:[#allocation5 + $0x538] sm:$0xff]
    %v1423 = vld [vmem:[#allocation5 + $0x540] sm:$0xff]
    %v1424 = vld [vmem:[#allocation5 + $0x548] sm:$0xff]
    %v1425 = vld [vmem:[#allocation5 + $0x550] sm:$0xff]
    %v1426 = vld [vmem:[#allocation5 + $0x558] sm:$0xff]
    %v1427 = vld [vmem:[#allocation5 + $0x560] sm:$0xff]
    %v1428 = vld [vmem:[#allocation5 + $0x568] sm:$0xff]
    %v1429 = vld [vmem:[#allocation5 + $0x570] sm:$0xff]
    %v1430 = vld [vmem:[#allocation5 + $0x578] sm:$0xff]
    %s1431 = scalar_lea.vmem [#allocation7], 96
    %v1432 = vld [vmem:[%s1431] ss:$8 sm:$0x3]
    %v1434 = vlaneseq
    %v1435 = vshrl.u32 %v1434, 7
    %v1436 = vsub.s32 0, %v1435
    %v1437 = vrot.slane %v1432, %v1436
    %v1438 = vlaneseq
    %v1439 = vshrl.u32 %v1438, 7
    %v1440 = vsub.s32 1, %v1439
    %v1441 = vrot.slane %v1432, %v1440
    %v1460 = vunpack.c.l.b16 %v1415
    %v1461 = vunpack.c.h.b16 %v1415
    %v1462 = vunpack.c.l.b16 %v1416
    %v1463 = vunpack.c.h.b16 %v1416
    %v1464 = vunpack.c.l.b16 %v1417
    %v1465 = vunpack.c.h.b16 %v1417
    %v1466 = vunpack.c.l.b16 %v1418
    %v1467 = vunpack.c.h.b16 %v1418
    %v1468 = vunpack.c.l.b16 %v1419
    %v1469 = vunpack.c.h.b16 %v1419
    %v1470 = vunpack.c.l.b16 %v1420
    %v1471 = vunpack.c.h.b16 %v1420
    %v1472 = vunpack.c.l.b16 %v1421
    %v1473 = vunpack.c.h.b16 %v1421
    %v1474 = vunpack.c.l.b16 %v1422
    %v1475 = vunpack.c.h.b16 %v1422
    %v1476 = vunpack.c.l.b16 %v1423
    %v1477 = vunpack.c.h.b16 %v1423
    %v1478 = vunpack.c.l.b16 %v1424
    %v1479 = vunpack.c.h.b16 %v1424
    %v1480 = vunpack.c.l.b16 %v1425
    %v1481 = vunpack.c.h.b16 %v1425
    %v1482 = vunpack.c.l.b16 %v1426
    %v1483 = vunpack.c.h.b16 %v1426
    %v1484 = vunpack.c.l.b16 %v1427
    %v1485 = vunpack.c.h.b16 %v1427
    %v1486 = vunpack.c.l.b16 %v1428
    %v1487 = vunpack.c.h.b16 %v1428
    %v1488 = vunpack.c.l.b16 %v1429
    %v1489 = vunpack.c.h.b16 %v1429
    %v1490 = vunpack.c.l.b16 %v1430
    %v1491 = vunpack.c.h.b16 %v1430
    %v1492 = vpack.c.b16 %v1462, %v1460
    %v1493 = vpack.c.b16 %v1463, %v1461
    %v1494 = vpack.c.b16 %v1466, %v1464
    %v1495 = vpack.c.b16 %v1467, %v1465
    %v1496 = vpack.c.b16 %v1470, %v1468
    %v1497 = vpack.c.b16 %v1471, %v1469
    %v1498 = vpack.c.b16 %v1474, %v1472
    %v1499 = vpack.c.b16 %v1475, %v1473
    %v1500 = vpack.c.b16 %v1478, %v1476
    %v1501 = vpack.c.b16 %v1479, %v1477
    %v1502 = vpack.c.b16 %v1482, %v1480
    %v1503 = vpack.c.b16 %v1483, %v1481
    %v1504 = vpack.c.b16 %v1486, %v1484
    %v1505 = vpack.c.b16 %v1487, %v1485
    %v1506 = vpack.c.b16 %v1490, %v1488
    %v1507 = vpack.c.b16 %v1491, %v1489
    %1524 = vmatprep.subr.bf16.mxu0 %v1507
    %1525 = vmatpush1.bf16.msra.mxu0 %v1506
    %1526 = vmatprep.subr.bf16.mxu0 %v1505
    %1527 = vmatpush1.bf16.msra.mxu0 %v1504
    %1528 = vmatprep.subr.bf16.mxu0 %v1503
    %1529 = vmatpush1.bf16.msra.mxu0 %v1502
    %1530 = vmatprep.subr.bf16.mxu0 %v1501
    %1531 = vmatpush1.bf16.msra.mxu0 %v1500
    %1532 = vmatprep.subr.bf16.mxu0 %v1499
    %1533 = vmatpush1.bf16.msra.mxu0 %v1498
    %1534 = vmatprep.subr.bf16.mxu0 %v1497
    %1535 = vmatpush1.bf16.msra.mxu0 %v1496
    %1536 = vmatprep.subr.bf16.mxu0 %v1495
    %1537 = vmatpush1.bf16.msra.mxu0 %v1494
    %1538 = vmatprep.subr.bf16.mxu0 %v1493
    %1539 = vmatpush1.bf16.msra.mxu0 %v1492
    %1540 = vmatprep.subr.bf16.mxu0 0
    %1541 = vmatpush2.bf16.msra.mxu0 0
    %1542 = vmatprep.subr.bf16.mxu0 0
    %1543 = vmatpush2.bf16.msra.mxu0 0
    %1544 = vmatprep.subr.bf16.mxu0 0
    %1545 = vmatpush2.bf16.msra.mxu0 0
    %1546 = vmatprep.subr.bf16.mxu0 0
    %1547 = vmatpush2.bf16.msra.mxu0 0
    %1548 = vmatprep.subr.bf16.mxu0 0
    %1549 = vmatpush2.bf16.msra.mxu0 0
    %1550 = vmatprep.subr.bf16.mxu0 0
    %1551 = vmatpush2.bf16.msra.mxu0 0
    %1552 = vmatprep.subr.bf16.mxu0 0
    %1553 = vmatpush2.bf16.msra.mxu0 0
    %1554 = vmatprep.subr.bf16.mxu0 0
    %1555 = vmatpush2.bf16.msra.mxu0 0
    %1556 = vmatprep.mubr.bf16.mxu0 0
    %1557 = vmatmul.mubr.bf16.gmra.mxu0 %v105
    %v1558 = vpop.f32.mrf.mxu0
    %v1559 = vadd.f32 %v1437, %v1558
    %v1560 = vpop.f32.mrf.mxu0
    %v1561 = vadd.f32 %v1441, %v1560
    %v1562 = vpop.f32.mrf.mxu0
    %v1563 = vpop.f32.mrf.mxu0
    %1564 = vdwg.mxu0
    %v1565 = vmul.f32 %v1559, 0.1
    %v1566 = vmul.f32 %v1561, 0.1
    %v1567 = vmax.f32 %v1559, %v1565
    %v1568 = vmax.f32 %v1561, %v1566
    %v1569 = vpack.c.bf16 %v1567, %v1567
    %v1570 = vpack.c.bf16 %v1568, %v1568
    %v1571 = vld [vmem:[#allocation5 + $0x580] sm:$0xff]
    %v1572 = vld [vmem:[#allocation5 + $0x588] sm:$0xff]
    %v1573 = vld [vmem:[#allocation5 + $0x590] sm:$0xff]
    %v1574 = vld [vmem:[#allocation5 + $0x598] sm:$0xff]
    %v1575 = vld [vmem:[#allocation5 + $0x5a0] sm:$0xff]
    %v1576 = vld [vmem:[#allocation5 + $0x5a8] sm:$0xff]
    %v1577 = vld [vmem:[#allocation5 + $0x5b0] sm:$0xff]
    %v1578 = vld [vmem:[#allocation5 + $0x5b8] sm:$0xff]
    %v1579 = vld [vmem:[#allocation5 + $0x5c0] sm:$0xff]
    %v1580 = vld [vmem:[#allocation5 + $0x5c8] sm:$0xff]
    %v1581 = vld [vmem:[#allocation5 + $0x5d0] sm:$0xff]
    %v1582 = vld [vmem:[#allocation5 + $0x5d8] sm:$0xff]
    %v1583 = vld [vmem:[#allocation5 + $0x5e0] sm:$0xff]
    %v1584 = vld [vmem:[#allocation5 + $0x5e8] sm:$0xff]
    %v1585 = vld [vmem:[#allocation5 + $0x5f0] sm:$0xff]
    %v1586 = vld [vmem:[#allocation5 + $0x5f8] sm:$0xff]
    %v1587 = vld [vmem:[#allocation5 + $0x600] sm:$0xff]
    %v1588 = vld [vmem:[#allocation5 + $0x608] sm:$0xff]
    %v1589 = vld [vmem:[#allocation5 + $0x610] sm:$0xff]
    %v1590 = vld [vmem:[#allocation5 + $0x618] sm:$0xff]
    %v1591 = vld [vmem:[#allocation5 + $0x620] sm:$0xff]
    %v1592 = vld [vmem:[#allocation5 + $0x628] sm:$0xff]
    %v1593 = vld [vmem:[#allocation5 + $0x630] sm:$0xff]
    %v1594 = vld [vmem:[#allocation5 + $0x638] sm:$0xff]
    %v1595 = vld [vmem:[#allocation5 + $0x640] sm:$0xff]
    %v1596 = vld [vmem:[#allocation5 + $0x648] sm:$0xff]
    %v1597 = vld [vmem:[#allocation5 + $0x650] sm:$0xff]
    %v1598 = vld [vmem:[#allocation5 + $0x658] sm:$0xff]
    %v1599 = vld [vmem:[#allocation5 + $0x660] sm:$0xff]
    %v1600 = vld [vmem:[#allocation5 + $0x668] sm:$0xff]
    %v1601 = vld [vmem:[#allocation5 + $0x670] sm:$0xff]
    %v1602 = vld [vmem:[#allocation5 + $0x678] sm:$0xff]
    %s1603 = scalar_lea.vmem [#allocation7], 112
    %v1604 = vld [vmem:[%s1603] ss:$8 sm:$0x3]
    %v1606 = vlaneseq
    %v1607 = vshrl.u32 %v1606, 7
    %v1608 = vsub.s32 0, %v1607
    %v1609 = vrot.slane %v1604, %v1608
    %v1610 = vlaneseq
    %v1611 = vshrl.u32 %v1610, 7
    %v1612 = vsub.s32 1, %v1611
    %v1613 = vrot.slane %v1604, %v1612
    %v1648 = vunpack.c.l.b16 %v1571
    %v1649 = vunpack.c.h.b16 %v1571
    %v1650 = vunpack.c.l.b16 %v1572
    %v1651 = vunpack.c.h.b16 %v1572
    %v1652 = vunpack.c.l.b16 %v1573
    %v1653 = vunpack.c.h.b16 %v1573
    %v1654 = vunpack.c.l.b16 %v1574
    %v1655 = vunpack.c.h.b16 %v1574
    %v1656 = vunpack.c.l.b16 %v1575
    %v1657 = vunpack.c.h.b16 %v1575
    %v1658 = vunpack.c.l.b16 %v1576
    %v1659 = vunpack.c.h.b16 %v1576
    %v1660 = vunpack.c.l.b16 %v1577
    %v1661 = vunpack.c.h.b16 %v1577
    %v1662 = vunpack.c.l.b16 %v1578
    %v1663 = vunpack.c.h.b16 %v1578
    %v1664 = vunpack.c.l.b16 %v1579
    %v1665 = vunpack.c.h.b16 %v1579
    %v1666 = vunpack.c.l.b16 %v1580
    %v1667 = vunpack.c.h.b16 %v1580
    %v1668 = vunpack.c.l.b16 %v1581
    %v1669 = vunpack.c.h.b16 %v1581
    %v1670 = vunpack.c.l.b16 %v1582
    %v1671 = vunpack.c.h.b16 %v1582
    %v1672 = vunpack.c.l.b16 %v1583
    %v1673 = vunpack.c.h.b16 %v1583
    %v1674 = vunpack.c.l.b16 %v1584
    %v1675 = vunpack.c.h.b16 %v1584
    %v1676 = vunpack.c.l.b16 %v1585
    %v1677 = vunpack.c.h.b16 %v1585
    %v1678 = vunpack.c.l.b16 %v1586
    %v1679 = vunpack.c.h.b16 %v1586
    %v1680 = vunpack.c.l.b16 %v1587
    %v1681 = vunpack.c.h.b16 %v1587
    %v1682 = vunpack.c.l.b16 %v1588
    %v1683 = vunpack.c.h.b16 %v1588
    %v1684 = vunpack.c.l.b16 %v1589
    %v1685 = vunpack.c.h.b16 %v1589
    %v1686 = vunpack.c.l.b16 %v1590
    %v1687 = vunpack.c.h.b16 %v1590
    %v1688 = vunpack.c.l.b16 %v1591
    %v1689 = vunpack.c.h.b16 %v1591
    %v1690 = vunpack.c.l.b16 %v1592
    %v1691 = vunpack.c.h.b16 %v1592
    %v1692 = vunpack.c.l.b16 %v1593
    %v1693 = vunpack.c.h.b16 %v1593
    %v1694 = vunpack.c.l.b16 %v1594
    %v1695 = vunpack.c.h.b16 %v1594
    %v1696 = vunpack.c.l.b16 %v1595
    %v1697 = vunpack.c.h.b16 %v1595
    %v1698 = vunpack.c.l.b16 %v1596
    %v1699 = vunpack.c.h.b16 %v1596
    %v1700 = vunpack.c.l.b16 %v1597
    %v1701 = vunpack.c.h.b16 %v1597
    %v1702 = vunpack.c.l.b16 %v1598
    %v1703 = vunpack.c.h.b16 %v1598
    %v1704 = vunpack.c.l.b16 %v1599
    %v1705 = vunpack.c.h.b16 %v1599
    %v1706 = vunpack.c.l.b16 %v1600
    %v1707 = vunpack.c.h.b16 %v1600
    %v1708 = vunpack.c.l.b16 %v1601
    %v1709 = vunpack.c.h.b16 %v1601
    %v1710 = vunpack.c.l.b16 %v1602
    %v1711 = vunpack.c.h.b16 %v1602
    %v1712 = vpack.c.b16 %v1650, %v1648
    %v1713 = vpack.c.b16 %v1651, %v1649
    %v1714 = vpack.c.b16 %v1654, %v1652
    %v1715 = vpack.c.b16 %v1655, %v1653
    %v1716 = vpack.c.b16 %v1658, %v1656
    %v1717 = vpack.c.b16 %v1659, %v1657
    %v1718 = vpack.c.b16 %v1662, %v1660
    %v1719 = vpack.c.b16 %v1663, %v1661
    %v1720 = vpack.c.b16 %v1666, %v1664
    %v1721 = vpack.c.b16 %v1667, %v1665
    %v1722 = vpack.c.b16 %v1670, %v1668
    %v1723 = vpack.c.b16 %v1671, %v1669
    %v1724 = vpack.c.b16 %v1674, %v1672
    %v1725 = vpack.c.b16 %v1675, %v1673
    %v1726 = vpack.c.b16 %v1678, %v1676
    %v1727 = vpack.c.b16 %v1679, %v1677
    %v1728 = vpack.c.b16 %v1682, %v1680
    %v1729 = vpack.c.b16 %v1683, %v1681
    %v1730 = vpack.c.b16 %v1686, %v1684
    %v1731 = vpack.c.b16 %v1687, %v1685
    %v1732 = vpack.c.b16 %v1690, %v1688
    %v1733 = vpack.c.b16 %v1691, %v1689
    %v1734 = vpack.c.b16 %v1694, %v1692
    %v1735 = vpack.c.b16 %v1695, %v1693
    %v1736 = vpack.c.b16 %v1698, %v1696
    %v1737 = vpack.c.b16 %v1699, %v1697
    %v1738 = vpack.c.b16 %v1702, %v1700
    %v1739 = vpack.c.b16 %v1703, %v1701
    %v1740 = vpack.c.b16 %v1706, %v1704
    %v1741 = vpack.c.b16 %v1707, %v1705
    %v1742 = vpack.c.b16 %v1710, %v1708
    %v1743 = vpack.c.b16 %v1711, %v1709
    %1776 = vmatprep.subr.bf16.mxu0 %v1727
    %1777 = vmatpush1.bf16.msra.mxu0 %v1726
    %1778 = vmatprep.subr.bf16.mxu0 %v1725
    %1779 = vmatpush1.bf16.msra.mxu0 %v1724
    %1780 = vmatprep.subr.bf16.mxu0 %v1723
    %1781 = vmatpush1.bf16.msra.mxu0 %v1722
    %1782 = vmatprep.subr.bf16.mxu0 %v1721
    %1783 = vmatpush1.bf16.msra.mxu0 %v1720
    %1784 = vmatprep.subr.bf16.mxu0 %v1719
    %1785 = vmatpush1.bf16.msra.mxu0 %v1718
    %1786 = vmatprep.subr.bf16.mxu0 %v1717
    %1787 = vmatpush1.bf16.msra.mxu0 %v1716
    %1788 = vmatprep.subr.bf16.mxu0 %v1715
    %1789 = vmatpush1.bf16.msra.mxu0 %v1714
    %1790 = vmatprep.subr.bf16.mxu0 %v1713
    %1791 = vmatpush1.bf16.msra.mxu0 %v1712
    %1792 = vmatprep.subr.bf16.mxu0 %v1743
    %1793 = vmatpush2.bf16.msra.mxu0 %v1742
    %1794 = vmatprep.subr.bf16.mxu0 %v1741
    %1795 = vmatpush2.bf16.msra.mxu0 %v1740
    %1796 = vmatprep.subr.bf16.mxu0 %v1739
    %1797 = vmatpush2.bf16.msra.mxu0 %v1738
    %1798 = vmatprep.subr.bf16.mxu0 %v1737
    %1799 = vmatpush2.bf16.msra.mxu0 %v1736
    %1800 = vmatprep.subr.bf16.mxu0 %v1735
    %1801 = vmatpush2.bf16.msra.mxu0 %v1734
    %1802 = vmatprep.subr.bf16.mxu0 %v1733
    %1803 = vmatpush2.bf16.msra.mxu0 %v1732
    %1804 = vmatprep.subr.bf16.mxu0 %v1731
    %1805 = vmatpush2.bf16.msra.mxu0 %v1730
    %1806 = vmatprep.subr.bf16.mxu0 %v1729
    %1807 = vmatpush2.bf16.msra.mxu0 %v1728
    %1808 = vmatprep.mubr.bf16.mxu0 %v1570
    %1809 = vmatmul.mubr.bf16.gmra.mxu0 %v1569
    %v1810 = vpop.f32.mrf.mxu0
    %v1811 = vadd.f32 %v1609, %v1810
    %v1812 = vpop.f32.mrf.mxu0
    %v1813 = vadd.f32 %v1613, %v1812
    %v1814 = vpop.f32.mrf.mxu0
    %v1815 = vpop.f32.mrf.mxu0
    %1816 = vdwg.mxu0
    %v1817 = vadd.f32 %v1413, %v1811
    %v1818 = vadd.f32 %v1414, %v1813
    %v1819 = vmul.f32 %v1817, 0.1
    %v1820 = vmul.f32 %v1818, 0.1
    %v1821 = vmax.f32 %v1817, %v1819
    %v1822 = vmax.f32 %v1818, %v1820
    %v1823 = vpack.c.bf16 %v1821, %v1821
    %v1824 = vpack.c.bf16 %v1822, %v1822
    %v1825 = vld [vmem:[#allocation11] sm:$0xf]
    %v1826 = vld [vmem:[#allocation11 + $0x4] sm:$0xf]
    %v1827 = vld [vmem:[#allocation11 + $0x8] sm:$0xf]
    %v1828 = vld [vmem:[#allocation11 + $0xc] sm:$0xf]
    %v1829 = vld [vmem:[#allocation11 + $0x10] sm:$0xf]
    %v1830 = vld [vmem:[#allocation11 + $0x14] sm:$0xf]
    %v1831 = vld [vmem:[#allocation11 + $0x18] sm:$0xf]
    %v1832 = vld [vmem:[#allocation11 + $0x1c] sm:$0xf]
    %v1833 = vld [vmem:[#allocation11 + $0x20] sm:$0xf]
    %v1834 = vld [vmem:[#allocation11 + $0x24] sm:$0xf]
    %v1835 = vld [vmem:[#allocation11 + $0x28] sm:$0xf]
    %v1836 = vld [vmem:[#allocation11 + $0x2c] sm:$0xf]
    %v1837 = vld [vmem:[#allocation11 + $0x30] sm:$0xf]
    %v1838 = vld [vmem:[#allocation11 + $0x34] sm:$0xf]
    %v1839 = vld [vmem:[#allocation11 + $0x38] sm:$0xf]
    %v1840 = vld [vmem:[#allocation11 + $0x3c] sm:$0xf]
    %v1841 = vld [vmem:[#allocation11 + $0x40] sm:$0xf]
    %v1842 = vld [vmem:[#allocation11 + $0x44] sm:$0xf]
    %v1843 = vld [vmem:[#allocation11 + $0x48] sm:$0xf]
    %v1844 = vld [vmem:[#allocation11 + $0x4c] sm:$0xf]
    %v1845 = vld [vmem:[#allocation11 + $0x50] sm:$0xf]
    %v1846 = vld [vmem:[#allocation11 + $0x54] sm:$0xf]
    %v1847 = vld [vmem:[#allocation11 + $0x58] sm:$0xf]
    %v1848 = vld [vmem:[#allocation11 + $0x5c] sm:$0xf]
    %v1849 = vld [vmem:[#allocation11 + $0x60] sm:$0xf]
    %v1850 = vld [vmem:[#allocation11 + $0x64] sm:$0xf]
    %v1851 = vld [vmem:[#allocation11 + $0x68] sm:$0xf]
    %v1852 = vld [vmem:[#allocation11 + $0x6c] sm:$0xf]
    %v1853 = vld [vmem:[#allocation11 + $0x70] sm:$0xf]
    %v1854 = vld [vmem:[#allocation11 + $0x74] sm:$0xf]
    %v1855 = vld [vmem:[#allocation11 + $0x78] sm:$0xf]
    %v1856 = vld [vmem:[#allocation11 + $0x7c] sm:$0xf]
    %v1857 = vld [vmem:[#allocation8] sm:$0xf]
    %v1858 = vld [vmem:[#allocation8 + $0x4] sm:$0xf]
    %v1859 = vld [vmem:[#allocation8 + $0x8] sm:$0xf]
    %v1860 = vld [vmem:[#allocation8 + $0xc] sm:$0xf]
    %v1861 = vld [vmem:[#allocation8 + $0x10] sm:$0xf]
    %v1862 = vld [vmem:[#allocation8 + $0x14] sm:$0xf]
    %v1863 = vld [vmem:[#allocation8 + $0x18] sm:$0xf]
    %v1864 = vld [vmem:[#allocation8 + $0x1c] sm:$0xf]
    %v1865 = vld [vmem:[#allocation8 + $0x20] sm:$0xf]
    %v1866 = vld [vmem:[#allocation8 + $0x24] sm:$0xf]
    %v1867 = vld [vmem:[#allocation8 + $0x28] sm:$0xf]
    %v1868 = vld [vmem:[#allocation8 + $0x2c] sm:$0xf]
    %v1869 = vld [vmem:[#allocation8 + $0x30] sm:$0xf]
    %v1870 = vld [vmem:[#allocation8 + $0x34] sm:$0xf]
    %v1871 = vld [vmem:[#allocation8 + $0x38] sm:$0xf]
    %v1872 = vld [vmem:[#allocation8 + $0x3c] sm:$0xf]
    %v1873 = vld [vmem:[#allocation10] sm:$0x1]
    %v1874 = vlaneseq
    %v1875 = vshrl.u32 %v1874, 7
    %v1876 = vsub.s32 0, %v1875
    %v1877 = vrot.slane %v1873, %v1876
    %v1894 = vunpack.c.l.b16 %v1857
    %v1895 = vunpack.c.l.b16 %v1858
    %v1896 = vunpack.c.l.b16 %v1859
    %v1897 = vunpack.c.l.b16 %v1860
    %v1898 = vunpack.c.l.b16 %v1861
    %v1899 = vunpack.c.l.b16 %v1862
    %v1900 = vunpack.c.l.b16 %v1863
    %v1901 = vunpack.c.l.b16 %v1864
    %v1902 = vunpack.c.l.b16 %v1865
    %v1903 = vunpack.c.l.b16 %v1866
    %v1904 = vunpack.c.l.b16 %v1867
    %v1905 = vunpack.c.l.b16 %v1868
    %v1906 = vunpack.c.l.b16 %v1869
    %v1907 = vunpack.c.l.b16 %v1870
    %v1908 = vunpack.c.l.b16 %v1871
    %v1909 = vunpack.c.l.b16 %v1872
    %v1910 = vpack.c.b16 %v1895, %v1894
    %v1911 = vpack.c.b16 %v1897, %v1896
    %v1912 = vpack.c.b16 %v1899, %v1898
    %v1913 = vpack.c.b16 %v1901, %v1900
    %v1914 = vpack.c.b16 %v1903, %v1902
    %v1915 = vpack.c.b16 %v1905, %v1904
    %v1916 = vpack.c.b16 %v1907, %v1906
    %v1917 = vpack.c.b16 %v1909, %v1908
    %1926 = vmatprep.subr.bf16.mxu0 0
    %1927 = vmatpush1.bf16.msra.mxu0 %v1917
    %1928 = vmatprep.subr.bf16.mxu0 0
    %1929 = vmatpush1.bf16.msra.mxu0 %v1916
    %1930 = vmatprep.subr.bf16.mxu0 0
    %1931 = vmatpush1.bf16.msra.mxu0 %v1915
    %1932 = vmatprep.subr.bf16.mxu0 0
    %1933 = vmatpush1.bf16.msra.mxu0 %v1914
    %1934 = vmatprep.subr.bf16.mxu0 0
    %1935 = vmatpush1.bf16.msra.mxu0 %v1913
    %1936 = vmatprep.subr.bf16.mxu0 0
    %1937 = vmatpush1.bf16.msra.mxu0 %v1912
    %1938 = vmatprep.subr.bf16.mxu0 0
    %1939 = vmatpush1.bf16.msra.mxu0 %v1911
    %1940 = vmatprep.subr.bf16.mxu0 0
    %1941 = vmatpush1.bf16.msra.mxu0 %v1910
    %1942 = vmatprep.subr.bf16.mxu0 0
    %1943 = vmatpush2.bf16.msra.mxu0 0
    %1944 = vmatprep.subr.bf16.mxu0 0
    %1945 = vmatpush2.bf16.msra.mxu0 0
    %1946 = vmatprep.subr.bf16.mxu0 0
    %1947 = vmatpush2.bf16.msra.mxu0 0
    %1948 = vmatprep.subr.bf16.mxu0 0
    %1949 = vmatpush2.bf16.msra.mxu0 0
    %1950 = vmatprep.subr.bf16.mxu0 0
    %1951 = vmatpush2.bf16.msra.mxu0 0
    %1952 = vmatprep.subr.bf16.mxu0 0
    %1953 = vmatpush2.bf16.msra.mxu0 0
    %1954 = vmatprep.subr.bf16.mxu0 0
    %1955 = vmatpush2.bf16.msra.mxu0 0
    %1956 = vmatprep.subr.bf16.mxu0 0
    %1957 = vmatpush2.bf16.msra.mxu0 0
    %1958 = vmatprep.mubr.bf16.mxu0 0
    %1959 = vmatmul.mubr.bf16.gmra.mxu0 %v105
    %v1960 = vpop.f32.mrf.mxu0
    %v1961 = vadd.f32 %v1877, %v1960
    %v1962 = vpop.f32.mrf.mxu0
    %v1963 = vpop.f32.mrf.mxu0
    %v1964 = vpop.f32.mrf.mxu0
    %1965 = vdwg.mxu0
    %v1966 = vmul.f32 %v1961, 0.1
    %v1967 = vmax.f32 %v1961, %v1966
    %v1968 = vlaneseq
    %v1969 = vand.u32 %v1968, 127
    %1970 = vadd.xlane.f32.xlu0 %v1967
    %v1971 = vpop.xlane.xlu0 %1970
    %v1972 = vmul.f32 %v1971, 0.125
    %v1973 = vsub.f32 %v1967, %v1972
    %vm1974 = vcmp.lt.s32.totalorder %v1969, 8
    %v1975 = vsel %vm1974, 1, 0
    %vm1976 = vcmp.eq.s32.totalorder %v1975, 1
    %v1977 = vsel %vm1976, %v1973, 0.0
    %v1978 = vmul.f32 %v1977, %v1977
    %1979 = vadd.xlane.f32.xlu0 %v1978
    %v1980 = vpop.xlane.xlu0 %1979
    %v1981 = vmul.f32 %v1980, 0.125
    %v1982 = vadd.f32 %v1981, 1e-05
    %v1983 = vrsqrt.pop %v1982
    %v1984 = vmul.f32 %v1973, %v1983
    %v1985 = vld [vmem:[#allocation10 + $0x8] sm:$0x1]
    %v1986 = vlaneseq
    %v1987 = vshrl.u32 %v1986, 7
    %v1988 = vsub.s32 0, %v1987
    %v1989 = vrot.slane %v1985, %v1988
    %v1990 = vmul.f32 %v1984, %v1989
    %v1991 = vld [vmem:[#allocation10 + $0x10] sm:$0x1]
    %v1992 = vlaneseq
    %v1993 = vshrl.u32 %v1992, 7
    %v1994 = vsub.s32 0, %v1993
    %v1995 = vrot.slane %v1991, %v1994
    %v1996 = vadd.f32 %v1990, %v1995
    %v1997 = vpack.c.bf16 %v1996, %v1996
    %v1998 = vld [vmem:[#allocation8 + $0x40] sm:$0xf]
    %v1999 = vld [vmem:[#allocation8 + $0x44] sm:$0xf]
    %v2000 = vld [vmem:[#allocation8 + $0x48] sm:$0xf]
    %v2001 = vld [vmem:[#allocation8 + $0x4c] sm:$0xf]
    %v2002 = vld [vmem:[#allocation8 + $0x50] sm:$0xf]
    %v2003 = vld [vmem:[#allocation8 + $0x54] sm:$0xf]
    %v2004 = vld [vmem:[#allocation8 + $0x58] sm:$0xf]
    %v2005 = vld [vmem:[#allocation8 + $0x5c] sm:$0xf]
    %v2006 = vld [vmem:[#allocation8 + $0x60] sm:$0xf]
    %v2007 = vld [vmem:[#allocation8 + $0x64] sm:$0xf]
    %v2008 = vld [vmem:[#allocation8 + $0x68] sm:$0xf]
    %v2009 = vld [vmem:[#allocation8 + $0x6c] sm:$0xf]
    %v2010 = vld [vmem:[#allocation8 + $0x70] sm:$0xf]
    %v2011 = vld [vmem:[#allocation8 + $0x74] sm:$0xf]
    %v2012 = vld [vmem:[#allocation8 + $0x78] sm:$0xf]
    %v2013 = vld [vmem:[#allocation8 + $0x7c] sm:$0xf]
    %v2014 = vld [vmem:[#allocation10 + $0x18] sm:$0x1]
    %v2015 = vlaneseq
    %v2016 = vshrl.u32 %v2015, 7
    %v2017 = vsub.s32 0, %v2016
    %v2018 = vrot.slane %v2014, %v2017
    %v2035 = vunpack.c.l.b16 %v1998
    %v2036 = vunpack.c.l.b16 %v1999
    %v2037 = vunpack.c.l.b16 %v2000
    %v2038 = vunpack.c.l.b16 %v2001
    %v2039 = vunpack.c.l.b16 %v2002
    %v2040 = vunpack.c.l.b16 %v2003
    %v2041 = vunpack.c.l.b16 %v2004
    %v2042 = vunpack.c.l.b16 %v2005
    %v2043 = vunpack.c.l.b16 %v2006
    %v2044 = vunpack.c.l.b16 %v2007
    %v2045 = vunpack.c.l.b16 %v2008
    %v2046 = vunpack.c.l.b16 %v2009
    %v2047 = vunpack.c.l.b16 %v2010
    %v2048 = vunpack.c.l.b16 %v2011
    %v2049 = vunpack.c.l.b16 %v2012
    %v2050 = vunpack.c.l.b16 %v2013
    %v2051 = vpack.c.b16 %v2036, %v2035
    %v2052 = vpack.c.b16 %v2038, %v2037
    %v2053 = vpack.c.b16 %v2040, %v2039
    %v2054 = vpack.c.b16 %v2042, %v2041
    %v2055 = vpack.c.b16 %v2044, %v2043
    %v2056 = vpack.c.b16 %v2046, %v2045
    %v2057 = vpack.c.b16 %v2048, %v2047
    %v2058 = vpack.c.b16 %v2050, %v2049
    %2067 = vmatprep.subr.bf16.mxu0 0
    %2068 = vmatpush1.bf16.msra.mxu0 %v2058
    %2069 = vmatprep.subr.bf16.mxu0 0
    %2070 = vmatpush1.bf16.msra.mxu0 %v2057
    %2071 = vmatprep.subr.bf16.mxu0 0
    %2072 = vmatpush1.bf16.msra.mxu0 %v2056
    %2073 = vmatprep.subr.bf16.mxu0 0
    %2074 = vmatpush1.bf16.msra.mxu0 %v2055
    %2075 = vmatprep.subr.bf16.mxu0 0
    %2076 = vmatpush1.bf16.msra.mxu0 %v2054
    %2077 = vmatprep.subr.bf16.mxu0 0
    %2078 = vmatpush1.bf16.msra.mxu0 %v2053
    %2079 = vmatprep.subr.bf16.mxu0 0
    %2080 = vmatpush1.bf16.msra.mxu0 %v2052
    %2081 = vmatprep.subr.bf16.mxu0 0
    %2082 = vmatpush1.bf16.msra.mxu0 %v2051
    %2083 = vmatprep.subr.bf16.mxu0 0
    %2084 = vmatpush2.bf16.msra.mxu0 0
    %2085 = vmatprep.subr.bf16.mxu0 0
    %2086 = vmatpush2.bf16.msra.mxu0 0
    %2087 = vmatprep.subr.bf16.mxu0 0
    %2088 = vmatpush2.bf16.msra.mxu0 0
    %2089 = vmatprep.subr.bf16.mxu0 0
    %2090 = vmatpush2.bf16.msra.mxu0 0
    %2091 = vmatprep.subr.bf16.mxu0 0
    %2092 = vmatpush2.bf16.msra.mxu0 0
    %2093 = vmatprep.subr.bf16.mxu0 0
    %2094 = vmatpush2.bf16.msra.mxu0 0
    %2095 = vmatprep.subr.bf16.mxu0 0
    %2096 = vmatpush2.bf16.msra.mxu0 0
    %2097 = vmatprep.subr.bf16.mxu0 0
    %2098 = vmatpush2.bf16.msra.mxu0 0
    %2099 = vmatprep.mubr.bf16.mxu0 0
    %2100 = vmatmul.mubr.bf16.gmra.mxu0 %v1997
    %v2101 = vpop.f32.mrf.mxu0
    %v2102 = vadd.f32 %v2018, %v2101
    %v2103 = vpop.f32.mrf.mxu0
    %v2104 = vpop.f32.mrf.mxu0
    %v2105 = vpop.f32.mrf.mxu0
    %2106 = vdwg.mxu0
    %v2107 = vmul.f32 %v2102, 0.1
    %v2108 = vmax.f32 %v2102, %v2107
    %v2109 = vld [vmem:[#allocation10 + $0x20] sm:$0x1]
    %v2110 = vlaneseq
    %v2111 = vshrl.u32 %v2110, 7
    %v2112 = vsub.s32 0, %v2111
    %v2113 = vrot.slane %v2109, %v2112
    %v2146 = vunpack.c.l.b16 %v1825
    %v2147 = vunpack.c.l.b16 %v1826
    %v2148 = vunpack.c.l.b16 %v1827
    %v2149 = vunpack.c.l.b16 %v1828
    %v2150 = vunpack.c.l.b16 %v1829
    %v2151 = vunpack.c.l.b16 %v1830
    %v2152 = vunpack.c.l.b16 %v1831
    %v2153 = vunpack.c.l.b16 %v1832
    %v2154 = vunpack.c.l.b16 %v1833
    %v2155 = vunpack.c.l.b16 %v1834
    %v2156 = vunpack.c.l.b16 %v1835
    %v2157 = vunpack.c.l.b16 %v1836
    %v2158 = vunpack.c.l.b16 %v1837
    %v2159 = vunpack.c.l.b16 %v1838
    %v2160 = vunpack.c.l.b16 %v1839
    %v2161 = vunpack.c.l.b16 %v1840
    %v2162 = vunpack.c.l.b16 %v1841
    %v2163 = vunpack.c.l.b16 %v1842
    %v2164 = vunpack.c.l.b16 %v1843
    %v2165 = vunpack.c.l.b16 %v1844
    %v2166 = vunpack.c.l.b16 %v1845
    %v2167 = vunpack.c.l.b16 %v1846
    %v2168 = vunpack.c.l.b16 %v1847
    %v2169 = vunpack.c.l.b16 %v1848
    %v2170 = vunpack.c.l.b16 %v1849
    %v2171 = vunpack.c.l.b16 %v1850
    %v2172 = vunpack.c.l.b16 %v1851
    %v2173 = vunpack.c.l.b16 %v1852
    %v2174 = vunpack.c.l.b16 %v1853
    %v2175 = vunpack.c.l.b16 %v1854
    %v2176 = vunpack.c.l.b16 %v1855
    %v2177 = vunpack.c.l.b16 %v1856
    %v2178 = vpack.c.b16 %v2147, %v2146
    %v2179 = vpack.c.b16 %v2149, %v2148
    %v2180 = vpack.c.b16 %v2151, %v2150
    %v2181 = vpack.c.b16 %v2153, %v2152
    %v2182 = vpack.c.b16 %v2155, %v2154
    %v2183 = vpack.c.b16 %v2157, %v2156
    %v2184 = vpack.c.b16 %v2159, %v2158
    %v2185 = vpack.c.b16 %v2161, %v2160
    %v2186 = vpack.c.b16 %v2163, %v2162
    %v2187 = vpack.c.b16 %v2165, %v2164
    %v2188 = vpack.c.b16 %v2167, %v2166
    %v2189 = vpack.c.b16 %v2169, %v2168
    %v2190 = vpack.c.b16 %v2171, %v2170
    %v2191 = vpack.c.b16 %v2173, %v2172
    %v2192 = vpack.c.b16 %v2175, %v2174
    %v2193 = vpack.c.b16 %v2177, %v2176
    %2210 = vmatprep.subr.bf16.mxu0 0
    %2211 = vmatpush1.bf16.msra.mxu0 %v2185
    %2212 = vmatprep.subr.bf16.mxu0 0
    %2213 = vmatpush1.bf16.msra.mxu0 %v2184
    %2214 = vmatprep.subr.bf16.mxu0 0
    %2215 = vmatpush1.bf16.msra.mxu0 %v2183
    %2216 = vmatprep.subr.bf16.mxu0 0
    %2217 = vmatpush1.bf16.msra.mxu0 %v2182
    %2218 = vmatprep.subr.bf16.mxu0 0
    %2219 = vmatpush1.bf16.msra.mxu0 %v2181
    %2220 = vmatprep.subr.bf16.mxu0 0
    %2221 = vmatpush1.bf16.msra.mxu0 %v2180
    %2222 = vmatprep.subr.bf16.mxu0 0
    %2223 = vmatpush1.bf16.msra.mxu0 %v2179
    %2224 = vmatprep.subr.bf16.mxu0 0
    %2225 = vmatpush1.bf16.msra.mxu0 %v2178
    %2226 = vmatprep.subr.bf16.mxu0 0
    %2227 = vmatpush2.bf16.msra.mxu0 %v2193
    %2228 = vmatprep.subr.bf16.mxu0 0
    %2229 = vmatpush2.bf16.msra.mxu0 %v2192
    %2230 = vmatprep.subr.bf16.mxu0 0
    %2231 = vmatpush2.bf16.msra.mxu0 %v2191
    %2232 = vmatprep.subr.bf16.mxu0 0
    %2233 = vmatpush2.bf16.msra.mxu0 %v2190
    %2234 = vmatprep.subr.bf16.mxu0 0
    %2235 = vmatpush2.bf16.msra.mxu0 %v2189
    %2236 = vmatprep.subr.bf16.mxu0 0
    %2237 = vmatpush2.bf16.msra.mxu0 %v2188
    %2238 = vmatprep.subr.bf16.mxu0 0
    %2239 = vmatpush2.bf16.msra.mxu0 %v2187
    %2240 = vmatprep.subr.bf16.mxu0 0
    %2241 = vmatpush2.bf16.msra.mxu0 %v2186
    %2242 = vmatprep.mubr.bf16.mxu0 %v1824
    %2243 = vmatmul.mubr.bf16.gmra.mxu0 %v1823
    %v2244 = vpop.f32.mrf.mxu0
    %v2245 = vadd.f32 %v2113, %v2244
    %v2246 = vpop.f32.mrf.mxu0
    %v2247 = vpop.f32.mrf.mxu0
    %v2248 = vpop.f32.mrf.mxu0
    %2249 = vdwg.mxu0
    %v2250 = vadd.f32 %v2108, %v2245
    %v2251 = vpack.c.bf16 %v2250, %v2250
    %v2252 = vld [vmem:[#allocation8 + $0x80] sm:$0xf]
    %v2253 = vld [vmem:[#allocation8 + $0x84] sm:$0xf]
    %v2254 = vld [vmem:[#allocation8 + $0x88] sm:$0xf]
    %v2255 = vld [vmem:[#allocation8 + $0x8c] sm:$0xf]
    %v2256 = vld [vmem:[#allocation8 + $0x90] sm:$0xf]
    %v2257 = vld [vmem:[#allocation8 + $0x94] sm:$0xf]
    %v2258 = vld [vmem:[#allocation8 + $0x98] sm:$0xf]
    %v2259 = vld [vmem:[#allocation8 + $0x9c] sm:$0xf]
    %v2260 = vld [vmem:[#allocation8 + $0xa0] sm:$0xf]
    %v2261 = vld [vmem:[#allocation8 + $0xa4] sm:$0xf]
    %v2262 = vld [vmem:[#allocation8 + $0xa8] sm:$0xf]
    %v2263 = vld [vmem:[#allocation8 + $0xac] sm:$0xf]
    %v2264 = vld [vmem:[#allocation8 + $0xb0] sm:$0xf]
    %v2265 = vld [vmem:[#allocation8 + $0xb4] sm:$0xf]
    %v2266 = vld [vmem:[#allocation8 + $0xb8] sm:$0xf]
    %v2267 = vld [vmem:[#allocation8 + $0xbc] sm:$0xf]
    %v2268 = vld [vmem:[#allocation10 + $0x28] sm:$0x1]
    %v2269 = vlaneseq
    %v2270 = vshrl.u32 %v2269, 7
    %v2271 = vsub.s32 0, %v2270
    %v2272 = vrot.slane %v2268, %v2271
    %v2289 = vunpack.c.l.b16 %v2252
    %v2290 = vunpack.c.l.b16 %v2253
    %v2291 = vunpack.c.l.b16 %v2254
    %v2292 = vunpack.c.l.b16 %v2255
    %v2293 = vunpack.c.l.b16 %v2256
    %v2294 = vunpack.c.l.b16 %v2257
    %v2295 = vunpack.c.l.b16 %v2258
    %v2296 = vunpack.c.l.b16 %v2259
    %v2297 = vunpack.c.l.b16 %v2260
    %v2298 = vunpack.c.l.b16 %v2261
    %v2299 = vunpack.c.l.b16 %v2262
    %v2300 = vunpack.c.l.b16 %v2263
    %v2301 = vunpack.c.l.b16 %v2264
    %v2302 = vunpack.c.l.b16 %v2265
    %v2303 = vunpack.c.l.b16 %v2266
    %v2304 = vunpack.c.l.b16 %v2267
    %v2305 = vpack.c.b16 %v2290, %v2289
    %v2306 = vpack.c.b16 %v2292, %v2291
    %v2307 = vpack.c.b16 %v2294, %v2293
    %v2308 = vpack.c.b16 %v2296, %v2295
    %v2309 = vpack.c.b16 %v2298, %v2297
    %v2310 = vpack.c.b16 %v2300, %v2299
    %v2311 = vpack.c.b16 %v2302, %v2301
    %v2312 = vpack.c.b16 %v2304, %v2303
    %2321 = vmatprep.subr.bf16.mxu0 0
    %2322 = vmatpush1.bf16.msra.mxu0 %v2312
    %2323 = vmatprep.subr.bf16.mxu0 0
    %2324 = vmatpush1.bf16.msra.mxu0 %v2311
    %2325 = vmatprep.subr.bf16.mxu0 0
    %2326 = vmatpush1.bf16.msra.mxu0 %v2310
    %2327 = vmatprep.subr.bf16.mxu0 0
    %2328 = vmatpush1.bf16.msra.mxu0 %v2309
    %2329 = vmatprep.subr.bf16.mxu0 0
    %2330 = vmatpush1.bf16.msra.mxu0 %v2308
    %2331 = vmatprep.subr.bf16.mxu0 0
    %2332 = vmatpush1.bf16.msra.mxu0 %v2307
    %2333 = vmatprep.subr.bf16.mxu0 0
    %2334 = vmatpush1.bf16.msra.mxu0 %v2306
    %2335 = vmatprep.subr.bf16.mxu0 0
    %2336 = vmatpush1.bf16.msra.mxu0 %v2305
    %2337 = vmatprep.subr.bf16.mxu0 0
    %2338 = vmatpush2.bf16.msra.mxu0 0
    %2339 = vmatprep.subr.bf16.mxu0 0
    %2340 = vmatpush2.bf16.msra.mxu0 0
    %2341 = vmatprep.subr.bf16.mxu0 0
    %2342 = vmatpush2.bf16.msra.mxu0 0
    %2343 = vmatprep.subr.bf16.mxu0 0
    %2344 = vmatpush2.bf16.msra.mxu0 0
    %2345 = vmatprep.subr.bf16.mxu0 0
    %2346 = vmatpush2.bf16.msra.mxu0 0
    %2347 = vmatprep.subr.bf16.mxu0 0
    %2348 = vmatpush2.bf16.msra.mxu0 0
    %2349 = vmatprep.subr.bf16.mxu0 0
    %2350 = vmatpush2.bf16.msra.mxu0 0
    %2351 = vmatprep.subr.bf16.mxu0 0
    %2352 = vmatpush2.bf16.msra.mxu0 0
    %2353 = vmatprep.mubr.bf16.mxu0 0
    %2354 = vmatmul.mubr.bf16.gmra.mxu0 %v2251
    %v2355 = vpop.f32.mrf.mxu0
    %v2356 = vadd.f32 %v2272, %v2355
    %v2357 = vpop.f32.mrf.mxu0
    %v2358 = vpop.f32.mrf.mxu0
    %v2359 = vpop.f32.mrf.mxu0
    %2360 = vdwg.mxu0
    %v2361 = vmul.f32 %v2356, 0.1
    %v2362 = vmax.f32 %v2356, %v2361
    %v2363 = vpack.c.bf16 %v1967, %v1967
    %v2364 = vld [vmem:[#allocation8 + $0xc0] sm:$0xf]
    %v2365 = vld [vmem:[#allocation8 + $0xc4] sm:$0xf]
    %v2366 = vld [vmem:[#allocation8 + $0xc8] sm:$0xf]
    %v2367 = vld [vmem:[#allocation8 + $0xcc] sm:$0xf]
    %v2368 = vld [vmem:[#allocation8 + $0xd0] sm:$0xf]
    %v2369 = vld [vmem:[#allocation8 + $0xd4] sm:$0xf]
    %v2370 = vld [vmem:[#allocation8 + $0xd8] sm:$0xf]
    %v2371 = vld [vmem:[#allocation8 + $0xdc] sm:$0xf]
    %v2372 = vld [vmem:[#allocation8 + $0xe0] sm:$0xf]
    %v2373 = vld [vmem:[#allocation8 + $0xe4] sm:$0xf]
    %v2374 = vld [vmem:[#allocation8 + $0xe8] sm:$0xf]
    %v2375 = vld [vmem:[#allocation8 + $0xec] sm:$0xf]
    %v2376 = vld [vmem:[#allocation8 + $0xf0] sm:$0xf]
    %v2377 = vld [vmem:[#allocation8 + $0xf4] sm:$0xf]
    %v2378 = vld [vmem:[#allocation8 + $0xf8] sm:$0xf]
    %v2379 = vld [vmem:[#allocation8 + $0xfc] sm:$0xf]
    %v2380 = vld [vmem:[#allocation10 + $0x30] sm:$0x1]
    %v2381 = vlaneseq
    %v2382 = vshrl.u32 %v2381, 7
    %v2383 = vsub.s32 0, %v2382
    %v2384 = vrot.slane %v2380, %v2383
    %v2401 = vunpack.c.l.b16 %v2364
    %v2402 = vunpack.c.l.b16 %v2365
    %v2403 = vunpack.c.l.b16 %v2366
    %v2404 = vunpack.c.l.b16 %v2367
    %v2405 = vunpack.c.l.b16 %v2368
    %v2406 = vunpack.c.l.b16 %v2369
    %v2407 = vunpack.c.l.b16 %v2370
    %v2408 = vunpack.c.l.b16 %v2371
    %v2409 = vunpack.c.l.b16 %v2372
    %v2410 = vunpack.c.l.b16 %v2373
    %v2411 = vunpack.c.l.b16 %v2374
    %v2412 = vunpack.c.l.b16 %v2375
    %v2413 = vunpack.c.l.b16 %v2376
    %v2414 = vunpack.c.l.b16 %v2377
    %v2415 = vunpack.c.l.b16 %v2378
    %v2416 = vunpack.c.l.b16 %v2379
    %v2417 = vpack.c.b16 %v2402, %v2401
    %v2418 = vpack.c.b16 %v2404, %v2403
    %v2419 = vpack.c.b16 %v2406, %v2405
    %v2420 = vpack.c.b16 %v2408, %v2407
    %v2421 = vpack.c.b16 %v2410, %v2409
    %v2422 = vpack.c.b16 %v2412, %v2411
    %v2423 = vpack.c.b16 %v2414, %v2413
    %v2424 = vpack.c.b16 %v2416, %v2415
    %2433 = vmatprep.subr.bf16.mxu0 0
    %2434 = vmatpush1.bf16.msra.mxu0 %v2424
    %2435 = vmatprep.subr.bf16.mxu0 0
    %2436 = vmatpush1.bf16.msra.mxu0 %v2423
    %2437 = vmatprep.subr.bf16.mxu0 0
    %2438 = vmatpush1.bf16.msra.mxu0 %v2422
    %2439 = vmatprep.subr.bf16.mxu0 0
    %2440 = vmatpush1.bf16.msra.mxu0 %v2421
    %2441 = vmatprep.subr.bf16.mxu0 0
    %2442 = vmatpush1.bf16.msra.mxu0 %v2420
    %2443 = vmatprep.subr.bf16.mxu0 0
    %2444 = vmatpush1.bf16.msra.mxu0 %v2419
    %2445 = vmatprep.subr.bf16.mxu0 0
    %2446 = vmatpush1.bf16.msra.mxu0 %v2418
    %2447 = vmatprep.subr.bf16.mxu0 0
    %2448 = vmatpush1.bf16.msra.mxu0 %v2417
    %2449 = vmatprep.subr.bf16.mxu0 0
    %2450 = vmatpush2.bf16.msra.mxu0 0
    %2451 = vmatprep.subr.bf16.mxu0 0
    %2452 = vmatpush2.bf16.msra.mxu0 0
    %2453 = vmatprep.subr.bf16.mxu0 0
    %2454 = vmatpush2.bf16.msra.mxu0 0
    %2455 = vmatprep.subr.bf16.mxu0 0
    %2456 = vmatpush2.bf16.msra.mxu0 0
    %2457 = vmatprep.subr.bf16.mxu0 0
    %2458 = vmatpush2.bf16.msra.mxu0 0
    %2459 = vmatprep.subr.bf16.mxu0 0
    %2460 = vmatpush2.bf16.msra.mxu0 0
    %2461 = vmatprep.subr.bf16.mxu0 0
    %2462 = vmatpush2.bf16.msra.mxu0 0
    %2463 = vmatprep.subr.bf16.mxu0 0
    %2464 = vmatpush2.bf16.msra.mxu0 0
    %2465 = vmatprep.mubr.bf16.mxu0 0
    %2466 = vmatmul.mubr.bf16.gmra.mxu0 %v2363
    %v2467 = vpop.f32.mrf.mxu0
    %v2468 = vadd.f32 %v2384, %v2467
    %v2469 = vpop.f32.mrf.mxu0
    %v2470 = vpop.f32.mrf.mxu0
    %v2471 = vpop.f32.mrf.mxu0
    %2472 = vdwg.mxu0
    %v2473 = vmul.f32 %v2468, 0.1
    %v2474 = vmax.f32 %v2468, %v2473
    %v2475 = vadd.f32 %v2362, %v2474
    %v2476 = vpack.c.bf16 %v2475, %v2475
    %v2477 = vld [vmem:[#allocation8 + $0x100] sm:$0xf]
    %v2478 = vld [vmem:[#allocation8 + $0x104] sm:$0xf]
    %v2479 = vld [vmem:[#allocation8 + $0x108] sm:$0xf]
    %v2480 = vld [vmem:[#allocation8 + $0x10c] sm:$0xf]
    %v2481 = vld [vmem:[#allocation8 + $0x110] sm:$0xf]
    %v2482 = vld [vmem:[#allocation8 + $0x114] sm:$0xf]
    %v2483 = vld [vmem:[#allocation8 + $0x118] sm:$0xf]
    %v2484 = vld [vmem:[#allocation8 + $0x11c] sm:$0xf]
    %v2485 = vld [vmem:[#allocation8 + $0x120] sm:$0xf]
    %v2486 = vld [vmem:[#allocation8 + $0x124] sm:$0xf]
    %v2487 = vld [vmem:[#allocation8 + $0x128] sm:$0xf]
    %v2488 = vld [vmem:[#allocation8 + $0x12c] sm:$0xf]
    %v2489 = vld [vmem:[#allocation8 + $0x130] sm:$0xf]
    %v2490 = vld [vmem:[#allocation8 + $0x134] sm:$0xf]
    %v2491 = vld [vmem:[#allocation8 + $0x138] sm:$0xf]
    %v2492 = vld [vmem:[#allocation8 + $0x13c] sm:$0xf]
    %v2493 = vld [vmem:[#allocation10 + $0x38] sm:$0x1]
    %v2494 = vlaneseq
    %v2495 = vshrl.u32 %v2494, 7
    %v2496 = vsub.s32 0, %v2495
    %v2497 = vrot.slane %v2493, %v2496
    %v2514 = vunpack.c.l.b16 %v2477
    %v2515 = vunpack.c.l.b16 %v2478
    %v2516 = vunpack.c.l.b16 %v2479
    %v2517 = vunpack.c.l.b16 %v2480
    %v2518 = vunpack.c.l.b16 %v2481
    %v2519 = vunpack.c.l.b16 %v2482
    %v2520 = vunpack.c.l.b16 %v2483
    %v2521 = vunpack.c.l.b16 %v2484
    %v2522 = vunpack.c.l.b16 %v2485
    %v2523 = vunpack.c.l.b16 %v2486
    %v2524 = vunpack.c.l.b16 %v2487
    %v2525 = vunpack.c.l.b16 %v2488
    %v2526 = vunpack.c.l.b16 %v2489
    %v2527 = vunpack.c.l.b16 %v2490
    %v2528 = vunpack.c.l.b16 %v2491
    %v2529 = vunpack.c.l.b16 %v2492
    %v2530 = vpack.c.b16 %v2515, %v2514
    %v2531 = vpack.c.b16 %v2517, %v2516
    %v2532 = vpack.c.b16 %v2519, %v2518
    %v2533 = vpack.c.b16 %v2521, %v2520
    %v2534 = vpack.c.b16 %v2523, %v2522
    %v2535 = vpack.c.b16 %v2525, %v2524
    %v2536 = vpack.c.b16 %v2527, %v2526
    %v2537 = vpack.c.b16 %v2529, %v2528
    %2546 = vmatprep.subr.bf16.mxu0 0
    %2547 = vmatpush1.bf16.msra.mxu0 %v2537
    %2548 = vmatprep.subr.bf16.mxu0 0
    %2549 = vmatpush1.bf16.msra.mxu0 %v2536
    %2550 = vmatprep.subr.bf16.mxu0 0
    %2551 = vmatpush1.bf16.msra.mxu0 %v2535
    %2552 = vmatprep.subr.bf16.mxu0 0
    %2553 = vmatpush1.bf16.msra.mxu0 %v2534
    %2554 = vmatprep.subr.bf16.mxu0 0
    %2555 = vmatpush1.bf16.msra.mxu0 %v2533
    %2556 = vmatprep.subr.bf16.mxu0 0
    %2557 = vmatpush1.bf16.msra.mxu0 %v2532
    %2558 = vmatprep.subr.bf16.mxu0 0
    %2559 = vmatpush1.bf16.msra.mxu0 %v2531
    %2560 = vmatprep.subr.bf16.mxu0 0
    %2561 = vmatpush1.bf16.msra.mxu0 %v2530
    %2562 = vmatprep.subr.bf16.mxu0 0
    %2563 = vmatpush2.bf16.msra.mxu0 0
    %2564 = vmatprep.subr.bf16.mxu0 0
    %2565 = vmatpush2.bf16.msra.mxu0 0
    %2566 = vmatprep.subr.bf16.mxu0 0
    %2567 = vmatpush2.bf16.msra.mxu0 0
    %2568 = vmatprep.subr.bf16.mxu0 0
    %2569 = vmatpush2.bf16.msra.mxu0 0
    %2570 = vmatprep.subr.bf16.mxu0 0
    %2571 = vmatpush2.bf16.msra.mxu0 0
    %2572 = vmatprep.subr.bf16.mxu0 0
    %2573 = vmatpush2.bf16.msra.mxu0 0
    %2574 = vmatprep.subr.bf16.mxu0 0
    %2575 = vmatpush2.bf16.msra.mxu0 0
    %2576 = vmatprep.subr.bf16.mxu0 0
    %2577 = vmatpush2.bf16.msra.mxu0 0
    %2578 = vmatprep.mubr.bf16.mxu0 0
    %2579 = vmatmul.mubr.bf16.gmra.mxu0 %v2476
    %v2580 = vpop.f32.mrf.mxu0
    %v2581 = vadd.f32 %v2497, %v2580
    %v2582 = vpop.f32.mrf.mxu0
    %v2583 = vpop.f32.mrf.mxu0
    %v2584 = vpop.f32.mrf.mxu0
    %2585 = vdwg.mxu0
    %v2586 = vmul.f32 %v2581, 0.1
    %v2587 = vmax.f32 %v2581, %v2586
    %v2588 = vpack.c.bf16 %v2587, %v2587
    %2589 = vst [vmem:[#allocation13] sm:$0xf] %v2588
    // Predicated region
    $region50: #{tpu_custom_call.1} parent=1 // pred_check
      _
    $region51: #{tpu_custom_call.1} parent=1 // pred_check_branch
      %2591 = sbr.rel (0) target = $region53
    $region52: #{tpu_custom_call.1} parent=1 // pred_region
      %s2593 = ssub.s32 64, 64
      %2594 = vsyncadd [#allocation4], %s2593
      %s2596 = sshll.u32 [#allocation13], 4
      %s2597 = int_to_ptr.vmem [resolvable:$true] %s2596
      %2599 = dma.vmem_to_hbm [thread:$0]  %s2597, 64, %s6, [#allocation4]
    $region53: #{tpu_custom_call.1} parent=1 // pred_fallthru
      _
    // Predicated region
    $region54: #{tpu_custom_call.1} parent=1 // pred_check
      _
    $region55: #{tpu_custom_call.1} parent=1 // pred_check_branch
      %2601 = sbr.rel (0) target = $region57
    $region56: #{tpu_custom_call.1} parent=1 // pred_region
      %2602 = dma.done [#allocation4], 64
    $region57: #{tpu_custom_call.1} parent=1 // pred_fallthru
      _
    %2603 = vsyncpa [#allocation3], 1
    %2604 = vsyncpa [#allocation6], 1
    %2605 = vsyncpa [#allocation9], 1
    %2606 = vsyncpa [#allocation12], 1
    %2607 = vsyncpa [#allocation4], 1

</llo_original>
